<compile_context>
chip_gen: v7x
topology: tpu7x:2x2x1
jax: 0.10.0
libtpu: 0.0.40
codegen_flags: <defaults>
</compile_context>

<pallas_src>
import numpy as np
import jax
import jax.numpy as jnp
from jax import lax
from jax.experimental import pallas as pl
from jax.experimental.pallas import tpu as pltpu


# ----------------------------------------------------------------------------
# LSTM layer kernel (single layer, unidirectional, zero initial state).
# Grid: (batch chunks [parallel], time chunks [arbitrary]).
#   x_ref   : (T_blk, Bc, I)   f32
#   wih_ref : (I, 4H)          bf16  (gate order i,f,g,o; g columns pre-scaled x2)
#   whh_ref : (H, 4H)          bf16  (g columns pre-scaled x2)
#   b_ref   : (1, 4H)          f32   (combined b_ih + b_hh; g columns x2)
#   out_ref : (T_blk, Bc, H)   f32
#   h_sc/c_sc : (Bc, H) f32 VMEM scratch carrying state across time chunks
#   gp_sc   : (T_blk, Bc, 4H) f32 VMEM scratch holding the input projection
# ----------------------------------------------------------------------------
def lstm_kernel(x_ref, wih_ref, whh_ref, b_ref, out_ref, h_sc, c_sc, gp_sc):
    T_blk, Bc, _ = x_ref.shape
    H = out_ref.shape[-1]

    @pl.when(pl.program_id(1) == 0)
    def _():
        h_sc[...] = jnp.zeros_like(h_sc)
        c_sc[...] = jnp.zeros_like(c_sc)

    wih = wih_ref[...]            # (I, 4H) bf16
    whh = whh_ref[...]            # (H, 4H) bf16
    bias = b_ref[...]             # (1, 4H) f32

    # Hoisted input projection: one GEMM for the whole time chunk, off the
    # serial critical path (bias folded in here, once).
    x_all = x_ref[...].reshape(T_blk * Bc, x_ref.shape[-1]).astype(jnp.bfloat16)
    gp_sc[...] = (jnp.dot(x_all, wih, preferred_element_type=jnp.float32)
                  + bias).reshape(T_blk, Bc, 4 * H)

    def step(t, carry):
        h, c = carry                                            # (Bc, H) f32
        gates = gp_sc[t] + jnp.dot(h.astype(jnp.bfloat16), whh,
                                   preferred_element_type=jnp.float32)
        s = jax.nn.sigmoid(gates)            # ONE full-width (Bc, 4H) EUP op
        i_g = s[:, 0 * H:1 * H]
        f_g = s[:, 1 * H:2 * H]
        g_g = 2.0 * s[:, 2 * H:3 * H] - 1.0  # tanh(x) = 2*sigmoid(2x) - 1
        o_g = s[:, 3 * H:4 * H]
        c_new = f_g * c + i_g * g_g
        h_new = o_g * jnp.tanh(c_new)
        out_ref[t] = h_new
        return h_new, c_new

    # Small unroll factor gives the scheduler cross-step overlap without
    # exploding code size at long T.
    unroll = T_blk if T_blk <= 8 else 4
    h_fin, c_fin = lax.fori_loop(0, T_blk, step, (h_sc[...], c_sc[...]),
                                 unroll=unroll)
    h_sc[...] = h_fin
    c_sc[...] = c_fin


def lstm_layer(x, wih, whh, b):
    """x: (T, B, I) f32 -> (T, B, H) f32. Weights: (I,4H), (H,4H), (1,4H)."""
    T, B, I = x.shape
    H4 = wih.shape[-1]
    H = H4 // 4

    # Whole padded batch per program; split in two only when there is enough
    # batch to feed a second TensorCore (v7x) without dropping MXU rows.
    b_chunk = B // 2 if (B >= 16 and B % 16 == 0) else B
    nb = B // b_chunk

    # Time chunking keeps resident VMEM bounded independent of sequence length.
    t_blk = T if T <= 128 else 128
    T_pad = ((T + t_blk - 1) // t_blk) * t_blk
    if T_pad != T:
        x = jnp.pad(x, ((0, T_pad - T), (0, 0), (0, 0)))
    nt = T_pad // t_blk

    # Fold the 2x scale of the tanh-via-sigmoid trick into the g-gate columns.
    wih_s = wih.at[:, 2 * H:3 * H].multiply(2.0).astype(jnp.bfloat16)
    whh_s = whh.at[:, 2 * H:3 * H].multiply(2.0).astype(jnp.bfloat16)
    b_s = b.at[:, 2 * H:3 * H].multiply(2.0)

    out = pl.pallas_call(
        lstm_kernel,
        out_shape=jax.ShapeDtypeStruct((T_pad, B, H), jnp.float32),
        grid=(nb, nt),
        in_specs=[
            pl.BlockSpec((t_blk, b_chunk, I), lambda bi, ti: (ti, bi, 0)),
            pl.BlockSpec((I, H4), lambda bi, ti: (0, 0)),
            pl.BlockSpec((H, H4), lambda bi, ti: (0, 0)),
            pl.BlockSpec((1, H4), lambda bi, ti: (0, 0)),
        ],
        out_specs=pl.BlockSpec((t_blk, b_chunk, H), lambda bi, ti: (ti, bi, 0)),
        scratch_shapes=[
            pltpu.VMEM((b_chunk, H), jnp.float32),        # h carry
            pltpu.VMEM((b_chunk, H), jnp.float32),        # c carry
            pltpu.VMEM((t_blk, b_chunk, H4), jnp.float32)  # input projection
        ],
        compiler_params=pltpu.CompilerParams(
            dimension_semantics=("parallel", "arbitrary")),
    )(x, wih_s, whh_s, b_s)
    return out[:T] if T_pad != T else out


# ----------------------------------------------------------------------------
# Joint network kernel.  Grid: (B [parallel], u-blocks [parallel]).
#   hf_ref : (1, T, J)            bf16   = f @ W1f + b1   (precomputed)
#   hg_ref : (1, u_blk, J)        bf16   = g @ W1g        (precomputed)
#   w2_ref : (J, Kp)              bf16
#   b2_ref : (1, Kp)              f32
#   out_ref: (1, T, u_blk, Kp)    f32    (final layout -> no wrapper transpose)
# ----------------------------------------------------------------------------
def joint_kernel(hf_ref, hg_ref, w2_ref, b2_ref, out_ref):
    _, T, J = hf_ref.shape
    u_blk = hg_ref.shape[1]
    Kp = out_ref.shape[-1]

    hf = hf_ref[0].astype(jnp.float32)        # (T, J)
    hg = hg_ref[0].astype(jnp.float32)        # (u_blk, J)
    w2 = w2_ref[...]                          # (J, Kp) bf16
    b2 = b2_ref[...]                          # (1, Kp) f32

    # u-blocked ReLU(broadcast-add) followed by ONE big GEMM (fills MXU rows).
    h = jnp.maximum(hf[:, None, :] + hg[None, :, :], 0.0)      # (T, u_blk, J)
    hb = h.reshape(T * u_blk, J).astype(jnp.bfloat16)
    logits = (jnp.dot(hb, w2, preferred_element_type=jnp.float32) + b2)
    out_ref[0] = logits.reshape(T, u_blk, Kp)


def joint_net(f, g, w1f, w1g, b1, w2, b2):
    """f: (B, T, He), g: (B, U+1, Hp) -> logits (B, T, U+1, K)."""
    B, T, He = f.shape
    _, U1, Hp = g.shape
    J, K = w2.shape
    Kp = ((K + 127) // 128) * 128             # lane-dense output width

    # First joint layer as two large bf16 batched GEMMs (plain XLA, f32 acc):
    # avoids recomputing g @ W1g for every t and halves DMA into the kernel.
    hf = (jnp.einsum('bth,hj->btj', f.astype(jnp.bfloat16),
                     w1f.astype(jnp.bfloat16),
                     preferred_element_type=jnp.float32) + b1).astype(jnp.bfloat16)
    hg = jnp.einsum('buh,hj->buj', g.astype(jnp.bfloat16),
                    w1g.astype(jnp.bfloat16),
                    preferred_element_type=jnp.float32).astype(jnp.bfloat16)

    # Block u so each program's output block stays small (v7x VMEM) and the
    # in-kernel reshape is sublane-aligned (u_blk multiple of 8).
    u_blk = 8 if U1 <= 8 else 32
    U1p = ((U1 + u_blk - 1) // u_blk) * u_blk
    if U1p != U1:
        hg = jnp.pad(hg, ((0, 0), (0, U1p - U1), (0, 0)))
    nu = U1p // u_blk

    w2p = jnp.zeros((J, Kp), jnp.float32).at[:, :K].set(w2).astype(jnp.bfloat16)
    b2p = jnp.zeros((1, Kp), jnp.float32).at[:, :K].set(b2)

    out = pl.pallas_call(
        joint_kernel,
        out_shape=jax.ShapeDtypeStruct((B, T, U1p, Kp), jnp.float32),
        grid=(B, nu),
        in_specs=[
            pl.BlockSpec((1, T, J), lambda bi, ui: (bi, 0, 0)),
            pl.BlockSpec((1, u_blk, J), lambda bi, ui: (bi, ui, 0)),
            pl.BlockSpec((J, Kp), lambda bi, ui: (0, 0)),
            pl.BlockSpec((1, Kp), lambda bi, ui: (0, 0)),
        ],
        out_specs=pl.BlockSpec((1, T, u_blk, Kp),
                               lambda bi, ui: (bi, 0, ui, 0)),
        compiler_params=pltpu.CompilerParams(
            dimension_semantics=("parallel", "parallel")),
    )(hf, hg, w2p, b2p)

    # Slice back to the PyTorch contract (B, T, U+1, K); consider keeping Kpad
    # through to the loss in production to avoid this narrow-minor copy.
    return out[:, :, :U1, :K]


# ----------------------------------------------------------------------------
# Plain-JAX glue reproducing the PyTorch module structure
# ----------------------------------------------------------------------------
def stack_time(x, x_lens, factor):
    """MLPerf StackTime: (T, B, H) -> (ceil(T/factor), B, H*factor)."""
    T, _, _ = x.shape
    seq = [x]
    for i in range(1, factor):
        tmp = jnp.zeros_like(x)
        tmp = tmp.at[: T - i].set(x[i:])
        seq.append(tmp)
    x_lens = jnp.ceil(x_lens.astype(jnp.float32) / factor).astype(jnp.int32)
    return jnp.concatenate(seq, axis=2)[::factor], x_lens


def label_collate(labels):
    # labels already an array -> just int cast (mirrors torch path).
    return labels.astype(jnp.int32)


def rnnt_forward(params, batch):
    (x, y), (x_lens, y_lens) = batch
    cfg = params["cfg"]

    # ---- pad batch to a multiple of 8 rows (sublanes / MXU rows) ----
    B0 = x.shape[1]
    B_pad = max(8, ((B0 + 7) // 8) * 8)
    if B_pad != B0:
        x = jnp.pad(x, ((0, 0), (0, B_pad - B0), (0, 0)))
        y = jnp.pad(y, ((0, B_pad - B0), (0, 0)))

    # ---- encode:  x (T, B, I) -> f (B, T', H_enc) ----
    h = x
    for (wih, whh, b) in params["enc_pre"]:
        h = lstm_layer(h, wih, whh, b)
    h, x_lens = stack_time(h, x_lens, cfg["stack_factor"])
    for (wih, whh, b) in params["enc_post"]:
        h = lstm_layer(h, wih, whh, b)
    f = jnp.transpose(h, (1, 0, 2))                       # (B, T', H_enc)

    # ---- predict:  y (B, U) -> g (B, U+1, H_pred) ----
    y = label_collate(y)
    emb = params["embed"][y]                              # (B, U, H_pred)
    sos = jnp.zeros((B_pad, 1, cfg["pred_n_hidden"]), dtype=emb.dtype)
    gin = jnp.concatenate([sos, emb], axis=1)             # (B, U+1, H_pred)
    gin = jnp.transpose(gin, (1, 0, 2))                   # (U+1, B, H_pred)
    for (wih, whh, b) in params["dec"]:
        gin = lstm_layer(gin, wih, whh, b)
    g = jnp.transpose(gin, (1, 0, 2))                     # (B, U+1, H_pred)

    # ---- joint ----  (logits beyond x_lens / y_lens / padded batch rows are
    # garbage-by-design and must be masked by the downstream loss)
    out = joint_net(f, g, *params["joint"])               # (B, T', U+1, K)
    out = out[:B0]                                        # drop batch padding
    return out, (x_lens, y_lens)


# ----------------------------------------------------------------------------
# Deterministic parameter construction (shapes follow RNNT.__init__).
# Fused-gate layout: wih (I, 4H), whh (H, 4H), b (1, 4H); gate order i,f,g,o.
# ----------------------------------------------------------------------------
def init_lstm_stack(key, in_dim, hidden, num_layers, forget_gate_bias):
    layers = []
    for l in range(num_layers):
        key, k1, k2, k3 = jax.random.split(key, 4)
        d_in = in_dim if l == 0 else hidden
        s = 1.0 / np.sqrt(hidden)
        wih = jax.random.uniform(k1, (d_in, 4 * hidden), jnp.float32, -s, s)
        whh = jax.random.uniform(k2, (hidden, 4 * hidden), jnp.float32, -s, s)
        b = jax.random.uniform(k3, (1, 4 * hidden), jnp.float32, -s, s)
        b = b.at[:, hidden:2 * hidden].set(forget_gate_bias)  # total forget-gate bias
        layers.append((wih, whh, b))
    return key, layers


def make_params(cfg):
    key = jax.random.PRNGKey(0)
    key, enc_pre = init_lstm_stack(key, cfg["in_features"], cfg["encoder_n_hidden"],
                                   cfg["encoder_pre_rnn_layers"], cfg["forget_gate_bias"])
    key, enc_post = init_lstm_stack(key, cfg["stack_factor"] * cfg["encoder_n_hidden"],
                                    cfg["encoder_n_hidden"],
                                    cfg["encoder_post_rnn_layers"], cfg["forget_gate_bias"])
    key, dec = init_lstm_stack(key, cfg["pred_n_hidden"], cfg["pred_n_hidden"],
                               cfg["pred_rnn_layers"], cfg["forget_gate_bias"])

    key, ke, k1, k2, k3, k4 = jax.random.split(key, 6)
    embed = jax.random.normal(ke, (cfg["num_classes"] - 1, cfg["pred_n_hidden"]),
                              jnp.float32) * 0.1

    He, Hp, J, K = (cfg["encoder_n_hidden"], cfg["pred_n_hidden"],
                    cfg["joint_n_hidden"], cfg["num_classes"])
    s1 = 1.0 / np.sqrt(He + Hp)
    w1 = jax.random.uniform(k1, (He + Hp, J), jnp.float32, -s1, s1)  # Linear1 weight^T
    b1 = jax.random.uniform(k2, (1, J), jnp.float32, -s1, s1)
    s2 = 1.0 / np.sqrt(J)
    w2 = jax.random.uniform(k3, (J, K), jnp.float32, -s2, s2)        # Linear2 weight^T
    b2 = jax.random.uniform(k4, (1, K), jnp.float32, -s2, s2)
    joint = (w1[:He], w1[He:], b1, w2, b2)   # split W1 into f-part / g-part (concat order f,g)

    return {"cfg": cfg, "enc_pre": enc_pre, "enc_post": enc_post,
            "dec": dec, "embed": embed, "joint": joint}


# ----------------------------------------------------------------------------
if __name__ == "__main__":
    cfg = dict(
        in_features=16,
        encoder_n_hidden=32,
        encoder_pre_rnn_layers=2,
        encoder_post_rnn_layers=2,
        stack_factor=2,               # encoder_stack_time_factor
        pred_n_hidden=32,
        pred_rnn_layers=2,
        joint_n_hidden=32,
        num_classes=29,               # vocab incl. blank
        forget_gate_bias=1.0,
        dropout=0.0,                  # inference: dropout is a no-op
    )
    # TODO(synk): batch-norm variants of the rnn() helper are not modeled (norm=None path).

    T, B, U = 8, 2, 4
    key = jax.random.PRNGKey(0)
    kx, ky = jax.random.split(key)
    x = jax.random.normal(kx, (T, B, cfg["in_features"]), jnp.float32)   # (T, B, I)
    y = jax.random.randint(ky, (B, U), 0, cfg["num_classes"] - 1)        # (B, U) labels
    x_lens = jnp.array([8, 6], jnp.int32)
    y_lens = jnp.array([4, 3], jnp.int32)

    params = make_params(cfg)
    (logits, (out_x_lens, out_y_lens)) = rnnt_forward(params, ((x, y), (x_lens, y_lens)))
    logits = jax.block_until_ready(logits)
    out_x_lens = jax.block_until_ready(out_x_lens)

    T_out = (T + cfg["stack_factor"] - 1) // cfg["stack_factor"]
    assert logits.shape == (B, T_out, U + 1, cfg["num_classes"]), logits.shape
    assert logits.dtype == jnp.float32
    assert bool(jnp.all(jnp.isfinite(logits)))
    print("KERNEL_OK")
</pallas_src>

<mosaic_0001>
module attributes {stable_mosaic.version = 11 : i64} {
  func.func @lstm_kernel(%arg0: i32, %arg1: i32, %arg2: memref<8x8x16xf32, #tpu.memory_space<vmem>>, %arg3: memref<16x128xbf16, #tpu.memory_space<vmem>>, %arg4: memref<32x128xbf16, #tpu.memory_space<vmem>>, %arg5: memref<1x128xf32, #tpu.memory_space<vmem>>, %arg6: memref<8x8x32xf32, #tpu.memory_space<vmem>>, %arg7: memref<8x32xf32, #tpu.memory_space<vmem>>, %arg8: memref<8x32xf32, #tpu.memory_space<vmem>>, %arg9: memref<8x8x128xf32, #tpu.memory_space<vmem>>) attributes {dimension_semantics = [#tpu.dimension_semantics<parallel>, #tpu.dimension_semantics<arbitrary>], iteration_bounds = array<i64: 1, 1>, scalar_prefetch = 0 : i64, scratch_operands = 3 : i64, tpu.core_type = #tpu.core_type<tc>, window_params = [{transform_indices = @transform_0, window_bounds = array<i64: 8, 8, 16>}, {pipeline_mode = #tpu.pipeline_mode<synchronous>, transform_indices = @transform_1, window_bounds = array<i64: 16, 128>}, {pipeline_mode = #tpu.pipeline_mode<synchronous>, transform_indices = @transform_2, window_bounds = array<i64: 32, 128>}, {pipeline_mode = #tpu.pipeline_mode<synchronous>, transform_indices = @transform_3, window_bounds = array<i64: 1, 128>}, {transform_indices = @transform_4, window_bounds = array<i64: 8, 8, 32>}]} {
    %c0_i32 = arith.constant 0 : i32
    %0 = arith.cmpi eq, %arg1, %c0_i32 : i32
    %1 = arith.extui %0 : i1 to i32
    %c0_i32_0 = arith.constant 0 : i32
    %2 = arith.cmpi ne, %1, %c0_i32_0 : i32
    scf.if %2 {
      %cst_85 = arith.constant 0.000000e+00 : f32
      %242 = vector.broadcast %cst_85 : f32 to vector<8x32xf32>
      %c0_86 = arith.constant 0 : index
      %c0_87 = arith.constant 0 : index
      %243 = vector.load %arg7[%c0_86, %c0_87] : memref<8x32xf32, #tpu.memory_space<vmem>>, vector<8x32xf32>
      tpu.vector_store %arg7[%c0_86, %c0_87], %242 {strides = array<i32>} : memref<8x32xf32, #tpu.memory_space<vmem>>, vector<8x32xf32>,
      %cst_88 = arith.constant 0.000000e+00 : f32
      %244 = vector.broadcast %cst_88 : f32 to vector<8x32xf32>
      %c0_89 = arith.constant 0 : index
      %c0_90 = arith.constant 0 : index
      %245 = vector.load %arg8[%c0_89, %c0_90] : memref<8x32xf32, #tpu.memory_space<vmem>>, vector<8x32xf32>
      tpu.vector_store %arg8[%c0_89, %c0_90], %244 {strides = array<i32>} : memref<8x32xf32, #tpu.memory_space<vmem>>, vector<8x32xf32>,
    } else {
    }
    %c0 = arith.constant 0 : index
    %c0_1 = arith.constant 0 : index
    %3 = vector.load %arg3[%c0, %c0_1] : memref<16x128xbf16, #tpu.memory_space<vmem>>, vector<16x128xbf16>
    %c0_2 = arith.constant 0 : index
    %c0_3 = arith.constant 0 : index
    %4 = vector.load %arg4[%c0_2, %c0_3] : memref<32x128xbf16, #tpu.memory_space<vmem>>, vector<32x128xbf16>
    %c0_4 = arith.constant 0 : index
    %c0_5 = arith.constant 0 : index
    %5 = vector.load %arg5[%c0_4, %c0_5] : memref<1x128xf32, #tpu.memory_space<vmem>>, vector<1x128xf32>
    %c0_6 = arith.constant 0 : index
    %c0_7 = arith.constant 0 : index
    %c0_8 = arith.constant 0 : index
    %6 = vector.load %arg2[%c0_6, %c0_7, %c0_8] : memref<8x8x16xf32, #tpu.memory_space<vmem>>, vector<8x8x16xf32>
    %7 = vector.shape_cast %6 : vector<8x8x16xf32> to vector<64x16xf32>
    %8 = arith.truncf %7 : vector<64x16xf32> to vector<64x16xbf16>
    %cst = arith.constant dense<0.000000e+00> : vector<64x128xf32>
    %9 = tpu.matmul %8, %3, %cst {dimension_numbers = #tpu.dot_dimension_numbers<[1], [0], [0], [1], [0, 0, 1, 1], [], []>} : vector<64x16xbf16>, vector<16x128xbf16>, vector<64x128xf32> -> vector<64x128xf32>
    %10 = vector.broadcast %5 : vector<1x128xf32> to vector<64x128xf32>
    %11 = arith.addf %9, %10 : vector<64x128xf32>
    %12 = vector.shape_cast %11 : vector<64x128xf32> to vector<8x8x128xf32>
    %c0_9 = arith.constant 0 : index
    %c0_10 = arith.constant 0 : index
    %c0_11 = arith.constant 0 : index
    %13 = vector.load %arg9[%c0_9, %c0_10, %c0_11] : memref<8x8x128xf32, #tpu.memory_space<vmem>>, vector<8x8x128xf32>
    tpu.vector_store %arg9[%c0_9, %c0_10, %c0_11], %12 {strides = array<i32>} : memref<8x8x128xf32, #tpu.memory_space<vmem>>, vector<8x8x128xf32>,
    %c0_12 = arith.constant 0 : index
    %c0_13 = arith.constant 0 : index
    %14 = vector.load %arg7[%c0_12, %c0_13] : memref<8x32xf32, #tpu.memory_space<vmem>>, vector<8x32xf32>
    %c0_14 = arith.constant 0 : index
    %c0_15 = arith.constant 0 : index
    %15 = vector.load %arg8[%c0_14, %c0_15] : memref<8x32xf32, #tpu.memory_space<vmem>>, vector<8x32xf32>
    %c0_i32_16 = arith.constant 0 : i32
    %16 = arith.index_cast %c0_i32_16 : i32 to index
    %c0_17 = arith.constant 0 : index
    %c0_18 = arith.constant 0 : index
    %17 = vector.load %arg9[%16, %c0_17, %c0_18] : memref<8x8x128xf32, #tpu.memory_space<vmem>>, vector<1x8x128xf32>
    %18 = vector.shape_cast %17 : vector<1x8x128xf32> to vector<8x128xf32>
    %19 = arith.truncf %14 : vector<8x32xf32> to vector<8x32xbf16>
    %cst_19 = arith.constant dense<0.000000e+00> : vector<8x128xf32>
    %20 = tpu.matmul %19, %4, %cst_19 {dimension_numbers = #tpu.dot_dimension_numbers<[1], [0], [0], [1], [0, 0, 1, 1], [], []>} : vector<8x32xbf16>, vector<32x128xbf16>, vector<8x128xf32> -> vector<8x128xf32>
    %21 = arith.addf %18, %20 : vector<8x128xf32>
    %22 = arith.negf %21 : vector<8x128xf32>
    %23 = math.exp %22 : vector<8x128xf32>
    %cst_20 = arith.constant 1.000000e+00 : f32
    %24 = vector.broadcast %cst_20 : f32 to vector<8x128xf32>
    %25 = arith.addf %24, %23 : vector<8x128xf32>
    %26 = arith.divf %24, %25 : vector<8x128xf32>
    %27 = vector.extract_strided_slice %26 {offsets = [0, 0], sizes = [8, 32], strides = [1, 1]} : vector<8x128xf32> to vector<8x32xf32>
    %28 = vector.extract_strided_slice %26 {offsets = [0, 32], sizes = [8, 32], strides = [1, 1]} : vector<8x128xf32> to vector<8x32xf32>
    %29 = vector.extract_strided_slice %26 {offsets = [0, 64], sizes = [8, 32], strides = [1, 1]} : vector<8x128xf32> to vector<8x32xf32>
    %cst_21 = arith.constant 2.000000e+00 : f32
    %30 = vector.broadcast %cst_21 : f32 to vector<8x32xf32>
    %31 = arith.mulf %30, %29 : vector<8x32xf32>
    %cst_22 = arith.constant 1.000000e+00 : f32
    %32 = vector.broadcast %cst_22 : f32 to vector<8x32xf32>
    %33 = arith.subf %31, %32 : vector<8x32xf32>
    %34 = vector.extract_strided_slice %26 {offsets = [0, 96], sizes = [8, 32], strides = [1, 1]} : vector<8x128xf32> to vector<8x32xf32>
    %35 = arith.mulf %28, %15 : vector<8x32xf32>
    %36 = arith.mulf %27, %33 : vector<8x32xf32>
    %37 = arith.addf %35, %36 : vector<8x32xf32>
    %38 = math.tanh %37 : vector<8x32xf32>
    %39 = arith.mulf %34, %38 : vector<8x32xf32>
    %40 = arith.index_cast %c0_i32_16 : i32 to index
    %c0_23 = arith.constant 0 : index
    %c0_24 = arith.constant 0 : index
    %41 = vector.load %arg6[%40, %c0_23, %c0_24] : memref<8x8x32xf32, #tpu.memory_space<vmem>>, vector<1x8x32xf32>
    %42 = vector.shape_cast %41 : vector<1x8x32xf32> to vector<8x32xf32>
    %43 = vector.shape_cast %39 : vector<8x32xf32> to vector<1x8x32xf32>
    tpu.vector_store %arg6[%40, %c0_23, %c0_24], %43 {strides = array<i32>} : memref<8x8x32xf32, #tpu.memory_space<vmem>>, vector<1x8x32xf32>,
    %c1_i32 = arith.constant 1 : i32
    %44 = arith.index_cast %c1_i32 : i32 to index
    %c0_25 = arith.constant 0 : index
    %c0_26 = arith.constant 0 : index
    %45 = vector.load %arg9[%44, %c0_25, %c0_26] : memref<8x8x128xf32, #tpu.memory_space<vmem>>, vector<1x8x128xf32>
    %46 = vector.shape_cast %45 : vector<1x8x128xf32> to vector<8x128xf32>
    %47 = arith.truncf %39 : vector<8x32xf32> to vector<8x32xbf16>
    %cst_27 = arith.constant dense<0.000000e+00> : vector<8x128xf32>
    %48 = tpu.matmul %47, %4, %cst_27 {dimension_numbers = #tpu.dot_dimension_numbers<[1], [0], [0], [1], [0, 0, 1, 1], [], []>} : vector<8x32xbf16>, vector<32x128xbf16>, vector<8x128xf32> -> vector<8x128xf32>
    %49 = arith.addf %46, %48 : vector<8x128xf32>
    %50 = arith.negf %49 : vector<8x128xf32>
    %51 = math.exp %50 : vector<8x128xf32>
    %cst_28 = arith.constant 1.000000e+00 : f32
    %52 = vector.broadcast %cst_28 : f32 to vector<8x128xf32>
    %53 = arith.addf %52, %51 : vector<8x128xf32>
    %54 = arith.divf %52, %53 : vector<8x128xf32>
    %55 = vector.extract_strided_slice %54 {offsets = [0, 0], sizes = [8, 32], strides = [1, 1]} : vector<8x128xf32> to vector<8x32xf32>
    %56 = vector.extract_strided_slice %54 {offsets = [0, 32], sizes = [8, 32], strides = [1, 1]} : vector<8x128xf32> to vector<8x32xf32>
    %57 = vector.extract_strided_slice %54 {offsets = [0, 64], sizes = [8, 32], strides = [1, 1]} : vector<8x128xf32> to vector<8x32xf32>
    %cst_29 = arith.constant 2.000000e+00 : f32
    %58 = vector.broadcast %cst_29 : f32 to vector<8x32xf32>
    %59 = arith.mulf %58, %57 : vector<8x32xf32>
    %cst_30 = arith.constant 1.000000e+00 : f32
    %60 = vector.broadcast %cst_30 : f32 to vector<8x32xf32>
    %61 = arith.subf %59, %60 : vector<8x32xf32>
    %62 = vector.extract_strided_slice %54 {offsets = [0, 96], sizes = [8, 32], strides = [1, 1]} : vector<8x128xf32> to vector<8x32xf32>
    %63 = arith.mulf %56, %37 : vector<8x32xf32>
    %64 = arith.mulf %55, %61 : vector<8x32xf32>
    %65 = arith.addf %63, %64 : vector<8x32xf32>
    %66 = math.tanh %65 : vector<8x32xf32>
    %67 = arith.mulf %62, %66 : vector<8x32xf32>
    %68 = arith.index_cast %c1_i32 : i32 to index
    %c0_31 = arith.constant 0 : index
    %c0_32 = arith.constant 0 : index
    %69 = vector.load %arg6[%68, %c0_31, %c0_32] : memref<8x8x32xf32, #tpu.memory_space<vmem>>, vector<1x8x32xf32>
    %70 = vector.shape_cast %69 : vector<1x8x32xf32> to vector<8x32xf32>
    %71 = vector.shape_cast %67 : vector<8x32xf32> to vector<1x8x32xf32>
    tpu.vector_store %arg6[%68, %c0_31, %c0_32], %71 {strides = array<i32>} : memref<8x8x32xf32, #tpu.memory_space<vmem>>, vector<1x8x32xf32>,
    %c2_i32 = arith.constant 2 : i32
    %72 = arith.index_cast %c2_i32 : i32 to index
    %c0_33 = arith.constant 0 : index
    %c0_34 = arith.constant 0 : index
    %73 = vector.load %arg9[%72, %c0_33, %c0_34] : memref<8x8x128xf32, #tpu.memory_space<vmem>>, vector<1x8x128xf32>
    %74 = vector.shape_cast %73 : vector<1x8x128xf32> to vector<8x128xf32>
    %75 = arith.truncf %67 : vector<8x32xf32> to vector<8x32xbf16>
    %cst_35 = arith.constant dense<0.000000e+00> : vector<8x128xf32>
    %76 = tpu.matmul %75, %4, %cst_35 {dimension_numbers = #tpu.dot_dimension_numbers<[1], [0], [0], [1], [0, 0, 1, 1], [], []>} : vector<8x32xbf16>, vector<32x128xbf16>, vector<8x128xf32> -> vector<8x128xf32>
    %77 = arith.addf %74, %76 : vector<8x128xf32>
    %78 = arith.negf %77 : vector<8x128xf32>
    %79 = math.exp %78 : vector<8x128xf32>
    %cst_36 = arith.constant 1.000000e+00 : f32
    %80 = vector.broadcast %cst_36 : f32 to vector<8x128xf32>
    %81 = arith.addf %80, %79 : vector<8x128xf32>
    %82 = arith.divf %80, %81 : vector<8x128xf32>
    %83 = vector.extract_strided_slice %82 {offsets = [0, 0], sizes = [8, 32], strides = [1, 1]} : vector<8x128xf32> to vector<8x32xf32>
    %84 = vector.extract_strided_slice %82 {offsets = [0, 32], sizes = [8, 32], strides = [1, 1]} : vector<8x128xf32> to vector<8x32xf32>
    %85 = vector.extract_strided_slice %82 {offsets = [0, 64], sizes = [8, 32], strides = [1, 1]} : vector<8x128xf32> to vector<8x32xf32>
    %cst_37 = arith.constant 2.000000e+00 : f32
    %86 = vector.broadcast %cst_37 : f32 to vector<8x32xf32>
    %87 = arith.mulf %86, %85 : vector<8x32xf32>
    %cst_38 = arith.constant 1.000000e+00 : f32
    %88 = vector.broadcast %cst_38 : f32 to vector<8x32xf32>
    %89 = arith.subf %87, %88 : vector<8x32xf32>
    %90 = vector.extract_strided_slice %82 {offsets = [0, 96], sizes = [8, 32], strides = [1, 1]} : vector<8x128xf32> to vector<8x32xf32>
    %91 = arith.mulf %84, %65 : vector<8x32xf32>
    %92 = arith.mulf %83, %89 : vector<8x32xf32>
    %93 = arith.addf %91, %92 : vector<8x32xf32>
    %94 = math.tanh %93 : vector<8x32xf32>
    %95 = arith.mulf %90, %94 : vector<8x32xf32>
    %96 = arith.index_cast %c2_i32 : i32 to index
    %c0_39 = arith.constant 0 : index
    %c0_40 = arith.constant 0 : index
    %97 = vector.load %arg6[%96, %c0_39, %c0_40] : memref<8x8x32xf32, #tpu.memory_space<vmem>>, vector<1x8x32xf32>
    %98 = vector.shape_cast %97 : vector<1x8x32xf32> to vector<8x32xf32>
    %99 = vector.shape_cast %95 : vector<8x32xf32> to vector<1x8x32xf32>
    tpu.vector_store %arg6[%96, %c0_39, %c0_40], %99 {strides = array<i32>} : memref<8x8x32xf32, #tpu.memory_space<vmem>>, vector<1x8x32xf32>,
    %c3_i32 = arith.constant 3 : i32
    %100 = arith.index_cast %c3_i32 : i32 to index
    %c0_41 = arith.constant 0 : index
    %c0_42 = arith.constant 0 : index
    %101 = vector.load %arg9[%100, %c0_41, %c0_42] : memref<8x8x128xf32, #tpu.memory_space<vmem>>, vector<1x8x128xf32>
    %102 = vector.shape_cast %101 : vector<1x8x128xf32> to vector<8x128xf32>
    %103 = arith.truncf %95 : vector<8x32xf32> to vector<8x32xbf16>
    %cst_43 = arith.constant dense<0.000000e+00> : vector<8x128xf32>
    %104 = tpu.matmul %103, %4, %cst_43 {dimension_numbers = #tpu.dot_dimension_numbers<[1], [0], [0], [1], [0, 0, 1, 1], [], []>} : vector<8x32xbf16>, vector<32x128xbf16>, vector<8x128xf32> -> vector<8x128xf32>
    %105 = arith.addf %102, %104 : vector<8x128xf32>
    %106 = arith.negf %105 : vector<8x128xf32>
    %107 = math.exp %106 : vector<8x128xf32>
    %cst_44 = arith.constant 1.000000e+00 : f32
    %108 = vector.broadcast %cst_44 : f32 to vector<8x128xf32>
    %109 = arith.addf %108, %107 : vector<8x128xf32>
    %110 = arith.divf %108, %109 : vector<8x128xf32>
    %111 = vector.extract_strided_slice %110 {offsets = [0, 0], sizes = [8, 32], strides = [1, 1]} : vector<8x128xf32> to vector<8x32xf32>
    %112 = vector.extract_strided_slice %110 {offsets = [0, 32], sizes = [8, 32], strides = [1, 1]} : vector<8x128xf32> to vector<8x32xf32>
    %113 = vector.extract_strided_slice %110 {offsets = [0, 64], sizes = [8, 32], strides = [1, 1]} : vector<8x128xf32> to vector<8x32xf32>
    %cst_45 = arith.constant 2.000000e+00 : f32
    %114 = vector.broadcast %cst_45 : f32 to vector<8x32xf32>
    %115 = arith.mulf %114, %113 : vector<8x32xf32>
    %cst_46 = arith.constant 1.000000e+00 : f32
    %116 = vector.broadcast %cst_46 : f32 to vector<8x32xf32>
    %117 = arith.subf %115, %116 : vector<8x32xf32>
    %118 = vector.extract_strided_slice %110 {offsets = [0, 96], sizes = [8, 32], strides = [1, 1]} : vector<8x128xf32> to vector<8x32xf32>
    %119 = arith.mulf %112, %93 : vector<8x32xf32>
    %120 = arith.mulf %111, %117 : vector<8x32xf32>
    %121 = arith.addf %119, %120 : vector<8x32xf32>
    %122 = math.tanh %121 : vector<8x32xf32>
    %123 = arith.mulf %118, %122 : vector<8x32xf32>
    %124 = arith.index_cast %c3_i32 : i32 to index
    %c0_47 = arith.constant 0 : index
    %c0_48 = arith.constant 0 : index
    %125 = vector.load %arg6[%124, %c0_47, %c0_48] : memref<8x8x32xf32, #tpu.memory_space<vmem>>, vector<1x8x32xf32>
    %126 = vector.shape_cast %125 : vector<1x8x32xf32> to vector<8x32xf32>
    %127 = vector.shape_cast %123 : vector<8x32xf32> to vector<1x8x32xf32>
    tpu.vector_store %arg6[%124, %c0_47, %c0_48], %127 {strides = array<i32>} : memref<8x8x32xf32, #tpu.memory_space<vmem>>, vector<1x8x32xf32>,
    %c4_i32 = arith.constant 4 : i32
    %128 = arith.index_cast %c4_i32 : i32 to index
    %c0_49 = arith.constant 0 : index
    %c0_50 = arith.constant 0 : index
    %129 = vector.load %arg9[%128, %c0_49, %c0_50] : memref<8x8x128xf32, #tpu.memory_space<vmem>>, vector<1x8x128xf32>
    %130 = vector.shape_cast %129 : vector<1x8x128xf32> to vector<8x128xf32>
    %131 = arith.truncf %123 : vector<8x32xf32> to vector<8x32xbf16>
    %cst_51 = arith.constant dense<0.000000e+00> : vector<8x128xf32>
    %132 = tpu.matmul %131, %4, %cst_51 {dimension_numbers = #tpu.dot_dimension_numbers<[1], [0], [0], [1], [0, 0, 1, 1], [], []>} : vector<8x32xbf16>, vector<32x128xbf16>, vector<8x128xf32> -> vector<8x128xf32>
    %133 = arith.addf %130, %132 : vector<8x128xf32>
    %134 = arith.negf %133 : vector<8x128xf32>
    %135 = math.exp %134 : vector<8x128xf32>
    %cst_52 = arith.constant 1.000000e+00 : f32
    %136 = vector.broadcast %cst_52 : f32 to vector<8x128xf32>
    %137 = arith.addf %136, %135 : vector<8x128xf32>
    %138 = arith.divf %136, %137 : vector<8x128xf32>
    %139 = vector.extract_strided_slice %138 {offsets = [0, 0], sizes = [8, 32], strides = [1, 1]} : vector<8x128xf32> to vector<8x32xf32>
    %140 = vector.extract_strided_slice %138 {offsets = [0, 32], sizes = [8, 32], strides = [1, 1]} : vector<8x128xf32> to vector<8x32xf32>
    %141 = vector.extract_strided_slice %138 {offsets = [0, 64], sizes = [8, 32], strides = [1, 1]} : vector<8x128xf32> to vector<8x32xf32>
    %cst_53 = arith.constant 2.000000e+00 : f32
    %142 = vector.broadcast %cst_53 : f32 to vector<8x32xf32>
    %143 = arith.mulf %142, %141 : vector<8x32xf32>
    %cst_54 = arith.constant 1.000000e+00 : f32
    %144 = vector.broadcast %cst_54 : f32 to vector<8x32xf32>
    %145 = arith.subf %143, %144 : vector<8x32xf32>
    %146 = vector.extract_strided_slice %138 {offsets = [0, 96], sizes = [8, 32], strides = [1, 1]} : vector<8x128xf32> to vector<8x32xf32>
    %147 = arith.mulf %140, %121 : vector<8x32xf32>
    %148 = arith.mulf %139, %145 : vector<8x32xf32>
    %149 = arith.addf %147, %148 : vector<8x32xf32>
    %150 = math.tanh %149 : vector<8x32xf32>
    %151 = arith.mulf %146, %150 : vector<8x32xf32>
    %152 = arith.index_cast %c4_i32 : i32 to index
    %c0_55 = arith.constant 0 : index
    %c0_56 = arith.constant 0 : index
    %153 = vector.load %arg6[%152, %c0_55, %c0_56] : memref<8x8x32xf32, #tpu.memory_space<vmem>>, vector<1x8x32xf32>
    %154 = vector.shape_cast %153 : vector<1x8x32xf32> to vector<8x32xf32>
    %155 = vector.shape_cast %151 : vector<8x32xf32> to vector<1x8x32xf32>
    tpu.vector_store %arg6[%152, %c0_55, %c0_56], %155 {strides = array<i32>} : memref<8x8x32xf32, #tpu.memory_space<vmem>>, vector<1x8x32xf32>,
    %c5_i32 = arith.constant 5 : i32
    %156 = arith.index_cast %c5_i32 : i32 to index
    %c0_57 = arith.constant 0 : index
    %c0_58 = arith.constant 0 : index
    %157 = vector.load %arg9[%156, %c0_57, %c0_58] : memref<8x8x128xf32, #tpu.memory_space<vmem>>, vector<1x8x128xf32>
    %158 = vector.shape_cast %157 : vector<1x8x128xf32> to vector<8x128xf32>
    %159 = arith.truncf %151 : vector<8x32xf32> to vector<8x32xbf16>
    %cst_59 = arith.constant dense<0.000000e+00> : vector<8x128xf32>
    %160 = tpu.matmul %159, %4, %cst_59 {dimension_numbers = #tpu.dot_dimension_numbers<[1], [0], [0], [1], [0, 0, 1, 1], [], []>} : vector<8x32xbf16>, vector<32x128xbf16>, vector<8x128xf32> -> vector<8x128xf32>
    %161 = arith.addf %158, %160 : vector<8x128xf32>
    %162 = arith.negf %161 : vector<8x128xf32>
    %163 = math.exp %162 : vector<8x128xf32>
    %cst_60 = arith.constant 1.000000e+00 : f32
    %164 = vector.broadcast %cst_60 : f32 to vector<8x128xf32>
    %165 = arith.addf %164, %163 : vector<8x128xf32>
    %166 = arith.divf %164, %165 : vector<8x128xf32>
    %167 = vector.extract_strided_slice %166 {offsets = [0, 0], sizes = [8, 32], strides = [1, 1]} : vector<8x128xf32> to vector<8x32xf32>
    %168 = vector.extract_strided_slice %166 {offsets = [0, 32], sizes = [8, 32], strides = [1, 1]} : vector<8x128xf32> to vector<8x32xf32>
    %169 = vector.extract_strided_slice %166 {offsets = [0, 64], sizes = [8, 32], strides = [1, 1]} : vector<8x128xf32> to vector<8x32xf32>
    %cst_61 = arith.constant 2.000000e+00 : f32
    %170 = vector.broadcast %cst_61 : f32 to vector<8x32xf32>
    %171 = arith.mulf %170, %169 : vector<8x32xf32>
    %cst_62 = arith.constant 1.000000e+00 : f32
    %172 = vector.broadcast %cst_62 : f32 to vector<8x32xf32>
    %173 = arith.subf %171, %172 : vector<8x32xf32>
    %174 = vector.extract_strided_slice %166 {offsets = [0, 96], sizes = [8, 32], strides = [1, 1]} : vector<8x128xf32> to vector<8x32xf32>
    %175 = arith.mulf %168, %149 : vector<8x32xf32>
    %176 = arith.mulf %167, %173 : vector<8x32xf32>
    %177 = arith.addf %175, %176 : vector<8x32xf32>
    %178 = math.tanh %177 : vector<8x32xf32>
    %179 = arith.mulf %174, %178 : vector<8x32xf32>
    %180 = arith.index_cast %c5_i32 : i32 to index
    %c0_63 = arith.constant 0 : index
    %c0_64 = arith.constant 0 : index
    %181 = vector.load %arg6[%180, %c0_63, %c0_64] : memref<8x8x32xf32, #tpu.memory_space<vmem>>, vector<1x8x32xf32>
    %182 = vector.shape_cast %181 : vector<1x8x32xf32> to vector<8x32xf32>
    %183 = vector.shape_cast %179 : vector<8x32xf32> to vector<1x8x32xf32>
    tpu.vector_store %arg6[%180, %c0_63, %c0_64], %183 {strides = array<i32>} : memref<8x8x32xf32, #tpu.memory_space<vmem>>, vector<1x8x32xf32>,
    %c6_i32 = arith.constant 6 : i32
    %184 = arith.index_cast %c6_i32 : i32 to index
    %c0_65 = arith.constant 0 : index
    %c0_66 = arith.constant 0 : index
    %185 = vector.load %arg9[%184, %c0_65, %c0_66] : memref<8x8x128xf32, #tpu.memory_space<vmem>>, vector<1x8x128xf32>
    %186 = vector.shape_cast %185 : vector<1x8x128xf32> to vector<8x128xf32>
    %187 = arith.truncf %179 : vector<8x32xf32> to vector<8x32xbf16>
    %cst_67 = arith.constant dense<0.000000e+00> : vector<8x128xf32>
    %188 = tpu.matmul %187, %4, %cst_67 {dimension_numbers = #tpu.dot_dimension_numbers<[1], [0], [0], [1], [0, 0, 1, 1], [], []>} : vector<8x32xbf16>, vector<32x128xbf16>, vector<8x128xf32> -> vector<8x128xf32>
    %189 = arith.addf %186, %188 : vector<8x128xf32>
    %190 = arith.negf %189 : vector<8x128xf32>
    %191 = math.exp %190 : vector<8x128xf32>
    %cst_68 = arith.constant 1.000000e+00 : f32
    %192 = vector.broadcast %cst_68 : f32 to vector<8x128xf32>
    %193 = arith.addf %192, %191 : vector<8x128xf32>
    %194 = arith.divf %192, %193 : vector<8x128xf32>
    %195 = vector.extract_strided_slice %194 {offsets = [0, 0], sizes = [8, 32], strides = [1, 1]} : vector<8x128xf32> to vector<8x32xf32>
    %196 = vector.extract_strided_slice %194 {offsets = [0, 32], sizes = [8, 32], strides = [1, 1]} : vector<8x128xf32> to vector<8x32xf32>
    %197 = vector.extract_strided_slice %194 {offsets = [0, 64], sizes = [8, 32], strides = [1, 1]} : vector<8x128xf32> to vector<8x32xf32>
    %cst_69 = arith.constant 2.000000e+00 : f32
    %198 = vector.broadcast %cst_69 : f32 to vector<8x32xf32>
    %199 = arith.mulf %198, %197 : vector<8x32xf32>
    %cst_70 = arith.constant 1.000000e+00 : f32
    %200 = vector.broadcast %cst_70 : f32 to vector<8x32xf32>
    %201 = arith.subf %199, %200 : vector<8x32xf32>
    %202 = vector.extract_strided_slice %194 {offsets = [0, 96], sizes = [8, 32], strides = [1, 1]} : vector<8x128xf32> to vector<8x32xf32>
    %203 = arith.mulf %196, %177 : vector<8x32xf32>
    %204 = arith.mulf %195, %201 : vector<8x32xf32>
    %205 = arith.addf %203, %204 : vector<8x32xf32>
    %206 = math.tanh %205 : vector<8x32xf32>
    %207 = arith.mulf %202, %206 : vector<8x32xf32>
    %208 = arith.index_cast %c6_i32 : i32 to index
    %c0_71 = arith.constant 0 : index
    %c0_72 = arith.constant 0 : index
    %209 = vector.load %arg6[%208, %c0_71, %c0_72] : memref<8x8x32xf32, #tpu.memory_space<vmem>>, vector<1x8x32xf32>
    %210 = vector.shape_cast %209 : vector<1x8x32xf32> to vector<8x32xf32>
    %211 = vector.shape_cast %207 : vector<8x32xf32> to vector<1x8x32xf32>
    tpu.vector_store %arg6[%208, %c0_71, %c0_72], %211 {strides = array<i32>} : memref<8x8x32xf32, #tpu.memory_space<vmem>>, vector<1x8x32xf32>,
    %c7_i32 = arith.constant 7 : i32
    %212 = arith.index_cast %c7_i32 : i32 to index
    %c0_73 = arith.constant 0 : index
    %c0_74 = arith.constant 0 : index
    %213 = vector.load %arg9[%212, %c0_73, %c0_74] : memref<8x8x128xf32, #tpu.memory_space<vmem>>, vector<1x8x128xf32>
    %214 = vector.shape_cast %213 : vector<1x8x128xf32> to vector<8x128xf32>
    %215 = arith.truncf %207 : vector<8x32xf32> to vector<8x32xbf16>
    %cst_75 = arith.constant dense<0.000000e+00> : vector<8x128xf32>
    %216 = tpu.matmul %215, %4, %cst_75 {dimension_numbers = #tpu.dot_dimension_numbers<[1], [0], [0], [1], [0, 0, 1, 1], [], []>} : vector<8x32xbf16>, vector<32x128xbf16>, vector<8x128xf32> -> vector<8x128xf32>
    %217 = arith.addf %214, %216 : vector<8x128xf32>
    %218 = arith.negf %217 : vector<8x128xf32>
    %219 = math.exp %218 : vector<8x128xf32>
    %cst_76 = arith.constant 1.000000e+00 : f32
    %220 = vector.broadcast %cst_76 : f32 to vector<8x128xf32>
    %221 = arith.addf %220, %219 : vector<8x128xf32>
    %222 = arith.divf %220, %221 : vector<8x128xf32>
    %223 = vector.extract_strided_slice %222 {offsets = [0, 0], sizes = [8, 32], strides = [1, 1]} : vector<8x128xf32> to vector<8x32xf32>
    %224 = vector.extract_strided_slice %222 {offsets = [0, 32], sizes = [8, 32], strides = [1, 1]} : vector<8x128xf32> to vector<8x32xf32>
    %225 = vector.extract_strided_slice %222 {offsets = [0, 64], sizes = [8, 32], strides = [1, 1]} : vector<8x128xf32> to vector<8x32xf32>
    %cst_77 = arith.constant 2.000000e+00 : f32
    %226 = vector.broadcast %cst_77 : f32 to vector<8x32xf32>
    %227 = arith.mulf %226, %225 : vector<8x32xf32>
    %cst_78 = arith.constant 1.000000e+00 : f32
    %228 = vector.broadcast %cst_78 : f32 to vector<8x32xf32>
    %229 = arith.subf %227, %228 : vector<8x32xf32>
    %230 = vector.extract_strided_slice %222 {offsets = [0, 96], sizes = [8, 32], strides = [1, 1]} : vector<8x128xf32> to vector<8x32xf32>
    %231 = arith.mulf %224, %205 : vector<8x32xf32>
    %232 = arith.mulf %223, %229 : vector<8x32xf32>
    %233 = arith.addf %231, %232 : vector<8x32xf32>
    %234 = math.tanh %233 : vector<8x32xf32>
    %235 = arith.mulf %230, %234 : vector<8x32xf32>
    %236 = arith.index_cast %c7_i32 : i32 to index
    %c0_79 = arith.constant 0 : index
    %c0_80 = arith.constant 0 : index
    %237 = vector.load %arg6[%236, %c0_79, %c0_80] : memref<8x8x32xf32, #tpu.memory_space<vmem>>, vector<1x8x32xf32>
    %238 = vector.shape_cast %237 : vector<1x8x32xf32> to vector<8x32xf32>
    %239 = vector.shape_cast %235 : vector<8x32xf32> to vector<1x8x32xf32>
    tpu.vector_store %arg6[%236, %c0_79, %c0_80], %239 {strides = array<i32>} : memref<8x8x32xf32, #tpu.memory_space<vmem>>, vector<1x8x32xf32>,
    %c8_i32 = arith.constant 8 : i32
    %c0_81 = arith.constant 0 : index
    %c0_82 = arith.constant 0 : index
    %240 = vector.load %arg7[%c0_81, %c0_82] : memref<8x32xf32, #tpu.memory_space<vmem>>, vector<8x32xf32>
    tpu.vector_store %arg7[%c0_81, %c0_82], %235 {strides = array<i32>} : memref<8x32xf32, #tpu.memory_space<vmem>>, vector<8x32xf32>,
    %c0_83 = arith.constant 0 : index
    %c0_84 = arith.constant 0 : index
    %241 = vector.load %arg8[%c0_83, %c0_84] : memref<8x32xf32, #tpu.memory_space<vmem>>, vector<8x32xf32>
    tpu.vector_store %arg8[%c0_83, %c0_84], %233 {strides = array<i32>} : memref<8x32xf32, #tpu.memory_space<vmem>>, vector<8x32xf32>,
    return
  }
  func.func @transform_0(%arg0: i32, %arg1: i32) -> (i32, i32, i32) {
    %c0_i32 = arith.constant 0 : i32
    %c0_i32_0 = arith.constant 0 : i32
    return %arg1, %arg0, %c0_i32 : i32, i32, i32
  }
  func.func @transform_1(%arg0: i32, %arg1: i32) -> (i32, i32) {
    %c0_i32 = arith.constant 0 : i32
    %c0_i32_0 = arith.constant 0 : i32
    %c0_i32_1 = arith.constant 0 : i32
    return %c0_i32, %c0_i32_0 : i32, i32
  }
  func.func @transform_2(%arg0: i32, %arg1: i32) -> (i32, i32) {
    %c0_i32 = arith.constant 0 : i32
    %c0_i32_0 = arith.constant 0 : i32
    %c0_i32_1 = arith.constant 0 : i32
    return %c0_i32, %c0_i32_0 : i32, i32
  }
  func.func @transform_3(%arg0: i32, %arg1: i32) -> (i32, i32) {
    %c0_i32 = arith.constant 0 : i32
    %c0_i32_0 = arith.constant 0 : i32
    %c0_i32_1 = arith.constant 0 : i32
    return %c0_i32, %c0_i32_0 : i32, i32
  }
  func.func @transform_4(%arg0: i32, %arg1: i32) -> (i32, i32, i32) {
    %c0_i32 = arith.constant 0 : i32
    %c0_i32_0 = arith.constant 0 : i32
    return %arg1, %arg0, %c0_i32 : i32, i32, i32
  }
}

</mosaic_0001>

<llo_original>
// kernel: tpu_custom_call.1
$region0: #{tpu_custom_call.1}
  #allocation0 [shape = 'u32[]', space=smem, size = 0x4, offset = 0x4, fixed_abs, tag = 'smem constant byte address 0x4 - core index']
  #allocation1 [shape = 'u32[144,128]{1,0:T(1,128)}', space=vmem, size = 0x12000, scoped, tag = 'internal scratch']
  #allocation2 [shape = 'f32[8,32]{1,0:T(8,128)}', space=vmem, size = 0x1000, scoped, tag = 'scratch operand']
  #allocation3 [shape = 'f32[8,32]{1,0:T(8,128)}', space=vmem, size = 0x1000, scoped, tag = 'scratch operand']
  #allocation4 [shape = 'f32[8,8,128]{2,1,0:T(8,128)}', space=vmem, size = 0x8000, scoped, tag = 'scratch operand']
  %s0 = inlined_call_operand.hbm [shape: f32[8,8,16], index: 0, kind: input, shape index: {}]
  %s1 = inlined_call_operand.hbm [shape: bf16[16,128], index: 1, kind: input, shape index: {}]
  %s2 = inlined_call_operand.hbm [shape: bf16[32,128], index: 2, kind: input, shape index: {}]
  %s3 = inlined_call_operand.vmem [shape: f32[1,128], index: 3, kind: input, shape index: {}]
  %s4 = inlined_call_operand.hbm [shape: f32[8,8,32], index: 4, kind: output, shape index: {}]
  %s5 = sld [smem:[#allocation0]]
  $region42: #{tpu_custom_call.1} parent=0
    _
  %s7 = ssub.s32 1, %s5
  %s8 = scalar_select 0, %s7, %s5
  $region1: #{tpu_custom_call.1} parent=0
    #allocation5 [shape = 'u8[32768]{0}', space=vmem, size = 0x8000, scoped, tag = 'input window, operand 0, single buffered']
    #allocation6 [shape = 's32[1]{0}', space=sflag, size = 0x4, scoped, tag = 'scoped memory for tpu_custom_call.1']
    #allocation7 [shape = 's32[1]{0}', space=sflag, size = 0x4, scoped, tag = 'scoped memory for tpu_custom_call.1']
    #allocation8 [shape = 'u8[4096]{0}', space=vmem, size = 0x1000, scoped, tag = 'input window, operand 1, single buffered']
    #allocation9 [shape = 's32[1]{0}', space=sflag, size = 0x4, scoped, tag = 'scoped memory for tpu_custom_call.1']
    #allocation10 [shape = 'u8[8192]{0}', space=vmem, size = 0x2000, scoped, tag = 'input window, operand 2, single buffered']
    #allocation11 [shape = 'u8[32768]{0}', space=vmem, size = 0x8000, scoped, tag = 'output window, operand 0, single buffered']
    %9 = vsyncpa [#allocation6], 0
    %10 = vsyncpa [#allocation9], 0
    %11 = vsyncpa [#allocation7], 0
    // Predicated region
    $region2: #{tpu_custom_call.1} parent=1 // pred_check
      _
    $region3: #{tpu_custom_call.1} parent=1 // pred_check_branch
      %13 = sbr.rel (0) target = $region5
    $region4: #{tpu_custom_call.1} parent=1 // pred_region
      %s15 = ssub.s32 1024, 1024
      %16 = vsyncadd [#allocation6], %s15
      %s17 = sshll.u32 [#allocation5], 4
      %s18 = int_to_ptr.vmem [resolvable:$true] %s17
      %23 = dma.hbm_to_vmem [thread:$0]  %s0, 1024, %s18, [#allocation6], 128, 128, 8
    $region5: #{tpu_custom_call.1} parent=1 // pred_fallthru
      _
    // Predicated region
    $region6: #{tpu_custom_call.1} parent=1 // pred_check
      _
    $region7: #{tpu_custom_call.1} parent=1 // pred_check_branch
      %25 = sbr.rel (0) target = $region9
    $region8: #{tpu_custom_call.1} parent=1 // pred_region
      %s27 = ssub.s32 128, 128
      %28 = vsyncadd [#allocation9], %s27
      %s29 = sshll.u32 [#allocation8], 4
      %s30 = int_to_ptr.vmem [resolvable:$true] %s29
      %35 = dma.hbm_to_vmem [thread:$0]  %s1, 128, %s30, [#allocation9], 64, 64, 4
    $region9: #{tpu_custom_call.1} parent=1 // pred_fallthru
      _
    // Predicated region
    $region10: #{tpu_custom_call.1} parent=1 // pred_check
      _
    $region11: #{tpu_custom_call.1} parent=1 // pred_check_branch
      %37 = sbr.rel (0) target = $region13
    $region12: #{tpu_custom_call.1} parent=1 // pred_region
      %s39 = ssub.s32 256, 256
      %40 = vsyncadd [#allocation9], %s39
      %s41 = sshll.u32 [#allocation10], 4
      %s42 = int_to_ptr.vmem [resolvable:$true] %s41
      %47 = dma.hbm_to_vmem [thread:$0]  %s2, 256, %s42, [#allocation9], 64, 64, 4
    $region13: #{tpu_custom_call.1} parent=1 // pred_fallthru
      _
    // Predicated region
    $region14: #{tpu_custom_call.1} parent=1 // pred_check
      _
    $region15: #{tpu_custom_call.1} parent=1 // pred_check_branch
      %49 = sbr.rel (0) target = $region17
    $region16: #{tpu_custom_call.1} parent=1 // pred_region
      _
    $region17: #{tpu_custom_call.1} parent=1 // pred_fallthru
      _
    // Predicated region
    $region18: #{tpu_custom_call.1} parent=1 // pred_check
      _
    $region19: #{tpu_custom_call.1} parent=1 // pred_check_branch
      %51 = sbr.rel (0) target = $region21
    $region20: #{tpu_custom_call.1} parent=1 // pred_region
      %52 = dma.done [#allocation6], 1024
    $region21: #{tpu_custom_call.1} parent=1 // pred_fallthru
      _
    // Predicated region
    $region22: #{tpu_custom_call.1} parent=1 // pred_check
      _
    $region23: #{tpu_custom_call.1} parent=1 // pred_check_branch
      %54 = sbr.rel (0) target = $region25
    $region24: #{tpu_custom_call.1} parent=1 // pred_region
      %55 = dma.done [#allocation9], 128
    $region25: #{tpu_custom_call.1} parent=1 // pred_fallthru
      _
    // Predicated region
    $region26: #{tpu_custom_call.1} parent=1 // pred_check
      _
    $region27: #{tpu_custom_call.1} parent=1 // pred_check_branch
      %57 = sbr.rel (0) target = $region29
    $region28: #{tpu_custom_call.1} parent=1 // pred_region
      %58 = dma.done [#allocation9], 256
    $region29: #{tpu_custom_call.1} parent=1 // pred_fallthru
      _
    %p60 = scmp.eq.s32.totalorder 0, 0
    // Predicated region
    $region30: #{tpu_custom_call.1} parent=1 // pred_check
      %p61 = pneg %p60
    $region31: #{tpu_custom_call.1} parent=1 // pred_check_branch
      %63 = sbr.rel (%p61) target = $region33
    $region32: #{tpu_custom_call.1} parent=1 // pred_region
      %vm64 = vcmask 261120
      %65 = vst.msk [vmem:[#allocation2] sm:$0xff] %vm64, 0.0
      %66 = vst.msk [vmem:[#allocation3] sm:$0xff] %vm64, 0.0
    $region33: #{tpu_custom_call.1} parent=1 // pred_fallthru
      _
    %v67 = vld [vmem:[#allocation8] sm:$0xf]
    %v68 = vld [vmem:[#allocation8 + $0x4] sm:$0xf]
    %v69 = vld [vmem:[#allocation10] sm:$0xf]
    %v70 = vld [vmem:[#allocation10 + $0x4] sm:$0xf]
    %v71 = vld [vmem:[#allocation10 + $0x8] sm:$0xf]
    %v72 = vld [vmem:[#allocation10 + $0xc] sm:$0xf]
    %v73 = vld [vmem:[%s3] sm:$0x1]
    %v74 = vld [vmem:[#allocation5] sm:$0xff]
    %v75 = vld [vmem:[#allocation5 + $0x8] sm:$0xff]
    %v76 = vld [vmem:[#allocation5 + $0x10] sm:$0xff]
    %v77 = vld [vmem:[#allocation5 + $0x18] sm:$0xff]
    %v78 = vld [vmem:[#allocation5 + $0x20] sm:$0xff]
    %v79 = vld [vmem:[#allocation5 + $0x28] sm:$0xff]
    %v80 = vld [vmem:[#allocation5 + $0x30] sm:$0xff]
    %v81 = vld [vmem:[#allocation5 + $0x38] sm:$0xff]
    %v82 = vpack.c.bf16 %v75, %v74
    %v83 = vpack.c.bf16 %v77, %v76
    %v84 = vpack.c.bf16 %v79, %v78
    %v85 = vpack.c.bf16 %v81, %v80
    %v87 = vlaneseq
    %v88 = vshrl.u32 %v87, 7
    %v89 = vsub.s32 0, %v88
    %v90 = vrot.slane %v73, %v89
    %v94 = vunpack.c.l.b16 %v67
    %v95 = vunpack.c.l.b16 %v68
    %v96 = vpack.c.b16 %v95, %v94
    %vm98 = vcmask 130048
    %v100 = vsel %vm98, %v82, 0
    %v103 = vsel %vm98, %v83, 0
    %v106 = vsel %vm98, %v84, 0
    %v109 = vsel %vm98, %v85, 0
    %111 = vmatprep.subr.bf16.mxu0 0
    %112 = vmatpush1.bf16.msra.mxu0 %v96
    %113 = vmatprep.subr.bf16.mxu0 0
    %114 = vmatpush1.bf16.msra.mxu0 0
    %115 = vmatprep.subr.bf16.mxu0 0
    %116 = vmatpush1.bf16.msra.mxu0 0
    %117 = vmatprep.subr.bf16.mxu0 0
    %118 = vmatpush1.bf16.msra.mxu0 0
    %119 = vmatprep.subr.bf16.mxu0 0
    %120 = vmatpush1.bf16.msra.mxu0 0
    %121 = vmatprep.subr.bf16.mxu0 0
    %122 = vmatpush1.bf16.msra.mxu0 0
    %123 = vmatprep.subr.bf16.mxu0 0
    %124 = vmatpush1.bf16.msra.mxu0 0
    %125 = vmatprep.subr.bf16.mxu0 0
    %126 = vmatpush1.bf16.msra.mxu0 0
    %127 = vmatprep.subr.bf16.mxu0 0
    %128 = vmatpush1.bf16.msra.mxu0 0
    %129 = vmatprep.subr.bf16.mxu0 0
    %130 = vmatpush1.bf16.msra.mxu0 0
    %131 = vmatprep.subr.bf16.mxu0 0
    %132 = vmatpush1.bf16.msra.mxu0 0
    %133 = vmatprep.subr.bf16.mxu0 0
    %134 = vmatpush1.bf16.msra.mxu0 0
    %135 = vmatprep.subr.bf16.mxu0 0
    %136 = vmatpush1.bf16.msra.mxu0 0
    %137 = vmatprep.subr.bf16.mxu0 0
    %138 = vmatpush1.bf16.msra.mxu0 0
    %139 = vmatprep.subr.bf16.mxu0 0
    %140 = vmatpush1.bf16.msra.mxu0 0
    %141 = vmatprep.subr.bf16.mxu0 0
    %142 = vmatpush1.bf16.msra.mxu0 0
    %143 = vmatprep.mubr.bf16.mxu0 0
    %144 = vmatmul.mubr.bf16.gmra.mrb[0].mxu0 %v100
    %v145 = vpop.f32.mrb[0].mxu0
    %v146 = vadd.f32 %v90, %v145
    %v147 = vpop.f32.mrb[0].mxu0
    %v148 = vpop.f32.mrb[0].mxu0
    %v149 = vadd.f32 %v90, %v148
    %v150 = vpop.f32.mrb[0].mxu0
    %151 = vmatprep.mubr.bf16.mxu0 0
    %152 = vmatmul.mubr.bf16.gmra.mrb[0].mxu0 %v103
    %v153 = vpop.f32.mrb[0].mxu0
    %v154 = vadd.f32 %v90, %v153
    %v155 = vpop.f32.mrb[0].mxu0
    %v156 = vpop.f32.mrb[0].mxu0
    %v157 = vadd.f32 %v90, %v156
    %v158 = vpop.f32.mrb[0].mxu0
    %159 = vmatprep.mubr.bf16.mxu0 0
    %160 = vmatmul.mubr.bf16.gmra.mrb[0].mxu0 %v106
    %v161 = vpop.f32.mrb[0].mxu0
    %v162 = vadd.f32 %v90, %v161
    %v163 = vpop.f32.mrb[0].mxu0
    %v164 = vpop.f32.mrb[0].mxu0
    %v165 = vadd.f32 %v90, %v164
    %v166 = vpop.f32.mrb[0].mxu0
    %167 = vmatprep.mubr.bf16.mxu0 0
    %168 = vmatmul.mubr.bf16.gmra.mrb[0].mxu0 %v109
    %v169 = vpop.f32.mrb[0].mxu0
    %v170 = vadd.f32 %v90, %v169
    %v171 = vpop.f32.mrb[0].mxu0
    %v172 = vpop.f32.mrb[0].mxu0
    %v173 = vadd.f32 %v90, %v172
    %v174 = vpop.f32.mrb[0].mxu0
    %175 = vdwg.mxu0
    %176 = vst [vmem:[#allocation4] sm:$0xff] %v146
    %177 = vst [vmem:[#allocation4 + $0x8] sm:$0xff] %v149
    %178 = vst [vmem:[#allocation4 + $0x10] sm:$0xff] %v154
    %179 = vst [vmem:[#allocation4 + $0x18] sm:$0xff] %v157
    %180 = vst [vmem:[#allocation4 + $0x20] sm:$0xff] %v162
    %181 = vst [vmem:[#allocation4 + $0x28] sm:$0xff] %v165
    %182 = vst [vmem:[#allocation4 + $0x30] sm:$0xff] %v170
    %183 = vst [vmem:[#allocation4 + $0x38] sm:$0xff] %v173
    %v184 = vld [vmem:[#allocation2] sm:$0xff]
    %v185 = vld [vmem:[#allocation3] sm:$0xff]
    %v186 = vld [vmem:[#allocation4] sm:$0xff]
    %v187 = vpack.c.bf16 %v184, %v184
    %v192 = vunpack.c.l.b16 %v69
    %v193 = vunpack.c.l.b16 %v70
    %v194 = vunpack.c.l.b16 %v71
    %v195 = vunpack.c.l.b16 %v72
    %v196 = vpack.c.b16 %v193, %v192
    %v197 = vpack.c.b16 %v195, %v194
    %vm200 = vcmask 261120
    %v202 = vsel %vm200, %v187, 0
    %204 = vmatprep.subr.bf16.mxu0 0
    %205 = vmatpush1.bf16.msra.mxu0 %v196
    %206 = vmatprep.subr.bf16.mxu0 0
    %207 = vmatpush1.bf16.msra.mxu0 %v197
    %208 = vmatprep.subr.bf16.mxu0 0
    %209 = vmatpush1.bf16.msra.mxu0 0
    %210 = vmatprep.subr.bf16.mxu0 0
    %211 = vmatpush1.bf16.msra.mxu0 0
    %212 = vmatprep.subr.bf16.mxu0 0
    %213 = vmatpush1.bf16.msra.mxu0 0
    %214 = vmatprep.subr.bf16.mxu0 0
    %215 = vmatpush1.bf16.msra.mxu0 0
    %216 = vmatprep.subr.bf16.mxu0 0
    %217 = vmatpush1.bf16.msra.mxu0 0
    %218 = vmatprep.subr.bf16.mxu0 0
    %219 = vmatpush1.bf16.msra.mxu0 0
    %220 = vmatprep.subr.bf16.mxu0 0
    %221 = vmatpush1.bf16.msra.mxu0 0
    %222 = vmatprep.subr.bf16.mxu0 0
    %223 = vmatpush1.bf16.msra.mxu0 0
    %224 = vmatprep.subr.bf16.mxu0 0
    %225 = vmatpush1.bf16.msra.mxu0 0
    %226 = vmatprep.subr.bf16.mxu0 0
    %227 = vmatpush1.bf16.msra.mxu0 0
    %228 = vmatprep.subr.bf16.mxu0 0
    %229 = vmatpush1.bf16.msra.mxu0 0
    %230 = vmatprep.subr.bf16.mxu0 0
    %231 = vmatpush1.bf16.msra.mxu0 0
    %232 = vmatprep.subr.bf16.mxu0 0
    %233 = vmatpush1.bf16.msra.mxu0 0
    %234 = vmatprep.subr.bf16.mxu0 0
    %235 = vmatpush1.bf16.msra.mxu0 0
    %236 = vmatprep.mubr.bf16.mxu0 0
    %237 = vmatmul.mubr.bf16.gmra.mrb[0].mxu0 %v202
    %v238 = vpop.f32.mrb[0].mxu0
    %v239 = vadd.f32 0.0, %v238
    %v240 = vpop.f32.mrb[0].mxu0
    %v241 = vpop.f32.mrb[0].mxu0
    %v242 = vpop.f32.mrb[0].mxu0
    %243 = vdwg.mxu0
    %v244 = vadd.f32 %v186, %v239
    %v245 = vxor.u32 %v244, 2147483648
    %v246 = vmul.f32 %v245, 1.442695
    %v247 = vpow.pop %v246
    %v248 = vadd.f32 %v247, 1.0
    %v249 = vrcp.pop %v248
    %v250 = vmul.f32 1.0, %v249
    %v251 = vmul.f32 %v250, 2.0
    %v252 = vsub.f32 %v251, 1.0
    %254 = vrot.lane.b32.xlu0 %v185, 32
    %v255 = vpop.permute.xlu0 %254
    %v257 = vmul.f32 %v250, %v255
    %259 = vrot.lane.b32.xlu0 %v252, 64
    %v260 = vpop.permute.xlu0 %259
    %v262 = vmul.f32 %v250, %v260
    %264 = vrot.lane.b32.xlu0 %v262, 32
    %v265 = vpop.permute.xlu0 %264
    %v267 = vadd.f32 %v257, %v265
    %v268 = vtanh.pop %v267
    %270 = vrot.lane.b32.xlu0 %v268, 64
    %v271 = vpop.permute.xlu0 %270
    %v273 = vmul.f32 %v250, %v271
    %275 = vrot.lane.b32.xlu0 %v273, 32
    %v276 = vpop.permute.xlu0 %275
    %278 = vst.msk [vmem:[#allocation11] sm:$0xff] %vm200, %v276
    %s279 = scalar_lea.vmem [#allocation4], 8
    %v280 = vld [vmem:[%s279] sm:$0xff]
    %v281 = vpack.c.bf16 %v273, %v273
    %283 = vrot.lane.b32.xlu0 %v281, 32
    %v284 = vpop.permute.xlu0 %283
    %v286 = vsel %vm200, %v284, 0
    %288 = vmatprep.subr.bf16.mxu0 0
    %289 = vmatpush1.bf16.msra.mxu0 %v196
    %290 = vmatprep.subr.bf16.mxu0 0
    %291 = vmatpush1.bf16.msra.mxu0 %v197
    %292 = vmatprep.subr.bf16.mxu0 0
    %293 = vmatpush1.bf16.msra.mxu0 0
    %294 = vmatprep.subr.bf16.mxu0 0
    %295 = vmatpush1.bf16.msra.mxu0 0
    %296 = vmatprep.subr.bf16.mxu0 0
    %297 = vmatpush1.bf16.msra.mxu0 0
    %298 = vmatprep.subr.bf16.mxu0 0
    %299 = vmatpush1.bf16.msra.mxu0 0
    %300 = vmatprep.subr.bf16.mxu0 0
    %301 = vmatpush1.bf16.msra.mxu0 0
    %302 = vmatprep.subr.bf16.mxu0 0
    %303 = vmatpush1.bf16.msra.mxu0 0
    %304 = vmatprep.subr.bf16.mxu0 0
    %305 = vmatpush1.bf16.msra.mxu0 0
    %306 = vmatprep.subr.bf16.mxu0 0
    %307 = vmatpush1.bf16.msra.mxu0 0
    %308 = vmatprep.subr.bf16.mxu0 0
    %309 = vmatpush1.bf16.msra.mxu0 0
    %310 = vmatprep.subr.bf16.mxu0 0
    %311 = vmatpush1.bf16.msra.mxu0 0
    %312 = vmatprep.subr.bf16.mxu0 0
    %313 = vmatpush1.bf16.msra.mxu0 0
    %314 = vmatprep.subr.bf16.mxu0 0
    %315 = vmatpush1.bf16.msra.mxu0 0
    %316 = vmatprep.subr.bf16.mxu0 0
    %317 = vmatpush1.bf16.msra.mxu0 0
    %318 = vmatprep.subr.bf16.mxu0 0
    %319 = vmatpush1.bf16.msra.mxu0 0
    %320 = vmatprep.mubr.bf16.mxu0 0
    %321 = vmatmul.mubr.bf16.gmra.mrb[0].mxu0 %v286
    %v322 = vpop.f32.mrb[0].mxu0
    %v323 = vadd.f32 0.0, %v322
    %v324 = vpop.f32.mrb[0].mxu0
    %v325 = vpop.f32.mrb[0].mxu0
    %v326 = vpop.f32.mrb[0].mxu0
    %327 = vdwg.mxu0
    %v328 = vadd.f32 %v280, %v323
    %v329 = vxor.u32 %v328, 2147483648
    %v330 = vmul.f32 %v329, 1.442695
    %v331 = vpow.pop %v330
    %v332 = vadd.f32 %v331, 1.0
    %v333 = vrcp.pop %v332
    %v334 = vmul.f32 1.0, %v333
    %v335 = vmul.f32 %v334, 2.0
    %v336 = vsub.f32 %v335, 1.0
    %v337 = vmul.f32 %v334, %v267
    %339 = vrot.lane.b32.xlu0 %v336, 64
    %v340 = vpop.permute.xlu0 %339
    %v342 = vmul.f32 %v334, %v340
    %344 = vrot.lane.b32.xlu0 %v342, 32
    %v345 = vpop.permute.xlu0 %344
    %v347 = vadd.f32 %v337, %v345
    %v348 = vtanh.pop %v347
    %350 = vrot.lane.b32.xlu0 %v348, 64
    %v351 = vpop.permute.xlu0 %350
    %v353 = vmul.f32 %v334, %v351
    %355 = vrot.lane.b32.xlu0 %v353, 32
    %v356 = vpop.permute.xlu0 %355
    %s358 = scalar_lea.vmem [#allocation11], 8
    %359 = vst.msk [vmem:[%s358] sm:$0xff] %vm200, %v356
    %s360 = scalar_lea.vmem [#allocation4], 16
    %v361 = vld [vmem:[%s360] sm:$0xff]
    %v362 = vpack.c.bf16 %v353, %v353
    %364 = vrot.lane.b32.xlu0 %v362, 32
    %v365 = vpop.permute.xlu0 %364
    %v367 = vsel %vm200, %v365, 0
    %369 = vmatprep.subr.bf16.mxu0 0
    %370 = vmatpush1.bf16.msra.mxu0 %v196
    %371 = vmatprep.subr.bf16.mxu0 0
    %372 = vmatpush1.bf16.msra.mxu0 %v197
    %373 = vmatprep.subr.bf16.mxu0 0
    %374 = vmatpush1.bf16.msra.mxu0 0
    %375 = vmatprep.subr.bf16.mxu0 0
    %376 = vmatpush1.bf16.msra.mxu0 0
    %377 = vmatprep.subr.bf16.mxu0 0
    %378 = vmatpush1.bf16.msra.mxu0 0
    %379 = vmatprep.subr.bf16.mxu0 0
    %380 = vmatpush1.bf16.msra.mxu0 0
    %381 = vmatprep.subr.bf16.mxu0 0
    %382 = vmatpush1.bf16.msra.mxu0 0
    %383 = vmatprep.subr.bf16.mxu0 0
    %384 = vmatpush1.bf16.msra.mxu0 0
    %385 = vmatprep.subr.bf16.mxu0 0
    %386 = vmatpush1.bf16.msra.mxu0 0
    %387 = vmatprep.subr.bf16.mxu0 0
    %388 = vmatpush1.bf16.msra.mxu0 0
    %389 = vmatprep.subr.bf16.mxu0 0
    %390 = vmatpush1.bf16.msra.mxu0 0
    %391 = vmatprep.subr.bf16.mxu0 0
    %392 = vmatpush1.bf16.msra.mxu0 0
    %393 = vmatprep.subr.bf16.mxu0 0
    %394 = vmatpush1.bf16.msra.mxu0 0
    %395 = vmatprep.subr.bf16.mxu0 0
    %396 = vmatpush1.bf16.msra.mxu0 0
    %397 = vmatprep.subr.bf16.mxu0 0
    %398 = vmatpush1.bf16.msra.mxu0 0
    %399 = vmatprep.subr.bf16.mxu0 0
    %400 = vmatpush1.bf16.msra.mxu0 0
    %401 = vmatprep.mubr.bf16.mxu0 0
    %402 = vmatmul.mubr.bf16.gmra.mrb[0].mxu0 %v367
    %v403 = vpop.f32.mrb[0].mxu0
    %v404 = vadd.f32 0.0, %v403
    %v405 = vpop.f32.mrb[0].mxu0
    %v406 = vpop.f32.mrb[0].mxu0
    %v407 = vpop.f32.mrb[0].mxu0
    %408 = vdwg.mxu0
    %v409 = vadd.f32 %v361, %v404
    %v410 = vxor.u32 %v409, 2147483648
    %v411 = vmul.f32 %v410, 1.442695
    %v412 = vpow.pop %v411
    %v413 = vadd.f32 %v412, 1.0
    %v414 = vrcp.pop %v413
    %v415 = vmul.f32 1.0, %v414
    %v416 = vmul.f32 %v415, 2.0
    %v417 = vsub.f32 %v416, 1.0
    %v418 = vmul.f32 %v415, %v347
    %420 = vrot.lane.b32.xlu0 %v417, 64
    %v421 = vpop.permute.xlu0 %420
    %v423 = vmul.f32 %v415, %v421
    %425 = vrot.lane.b32.xlu0 %v423, 32
    %v426 = vpop.permute.xlu0 %425
    %v428 = vadd.f32 %v418, %v426
    %v429 = vtanh.pop %v428
    %431 = vrot.lane.b32.xlu0 %v429, 64
    %v432 = vpop.permute.xlu0 %431
    %v434 = vmul.f32 %v415, %v432
    %436 = vrot.lane.b32.xlu0 %v434, 32
    %v437 = vpop.permute.xlu0 %436
    %s439 = scalar_lea.vmem [#allocation11], 16
    %440 = vst.msk [vmem:[%s439] sm:$0xff] %vm200, %v437
    %s441 = scalar_lea.vmem [#allocation4], 24
    %v442 = vld [vmem:[%s441] sm:$0xff]
    %v443 = vpack.c.bf16 %v434, %v434
    %445 = vrot.lane.b32.xlu0 %v443, 32
    %v446 = vpop.permute.xlu0 %445
    %v448 = vsel %vm200, %v446, 0
    %450 = vmatprep.subr.bf16.mxu0 0
    %451 = vmatpush1.bf16.msra.mxu0 %v196
    %452 = vmatprep.subr.bf16.mxu0 0
    %453 = vmatpush1.bf16.msra.mxu0 %v197
    %454 = vmatprep.subr.bf16.mxu0 0
    %455 = vmatpush1.bf16.msra.mxu0 0
    %456 = vmatprep.subr.bf16.mxu0 0
    %457 = vmatpush1.bf16.msra.mxu0 0
    %458 = vmatprep.subr.bf16.mxu0 0
    %459 = vmatpush1.bf16.msra.mxu0 0
    %460 = vmatprep.subr.bf16.mxu0 0
    %461 = vmatpush1.bf16.msra.mxu0 0
    %462 = vmatprep.subr.bf16.mxu0 0
    %463 = vmatpush1.bf16.msra.mxu0 0
    %464 = vmatprep.subr.bf16.mxu0 0
    %465 = vmatpush1.bf16.msra.mxu0 0
    %466 = vmatprep.subr.bf16.mxu0 0
    %467 = vmatpush1.bf16.msra.mxu0 0
    %468 = vmatprep.subr.bf16.mxu0 0
    %469 = vmatpush1.bf16.msra.mxu0 0
    %470 = vmatprep.subr.bf16.mxu0 0
    %471 = vmatpush1.bf16.msra.mxu0 0
    %472 = vmatprep.subr.bf16.mxu0 0
    %473 = vmatpush1.bf16.msra.mxu0 0
    %474 = vmatprep.subr.bf16.mxu0 0
    %475 = vmatpush1.bf16.msra.mxu0 0
    %476 = vmatprep.subr.bf16.mxu0 0
    %477 = vmatpush1.bf16.msra.mxu0 0
    %478 = vmatprep.subr.bf16.mxu0 0
    %479 = vmatpush1.bf16.msra.mxu0 0
    %480 = vmatprep.subr.bf16.mxu0 0
    %481 = vmatpush1.bf16.msra.mxu0 0
    %482 = vmatprep.mubr.bf16.mxu0 0
    %483 = vmatmul.mubr.bf16.gmra.mrb[0].mxu0 %v448
    %v484 = vpop.f32.mrb[0].mxu0
    %v485 = vadd.f32 0.0, %v484
    %v486 = vpop.f32.mrb[0].mxu0
    %v487 = vpop.f32.mrb[0].mxu0
    %v488 = vpop.f32.mrb[0].mxu0
    %489 = vdwg.mxu0
    %v490 = vadd.f32 %v442, %v485
    %v491 = vxor.u32 %v490, 2147483648
    %v492 = vmul.f32 %v491, 1.442695
    %v493 = vpow.pop %v492
    %v494 = vadd.f32 %v493, 1.0
    %v495 = vrcp.pop %v494
    %v496 = vmul.f32 1.0, %v495
    %v497 = vmul.f32 %v496, 2.0
    %v498 = vsub.f32 %v497, 1.0
    %v499 = vmul.f32 %v496, %v428
    %501 = vrot.lane.b32.xlu0 %v498, 64
    %v502 = vpop.permute.xlu0 %501
    %v504 = vmul.f32 %v496, %v502
    %506 = vrot.lane.b32.xlu0 %v504, 32
    %v507 = vpop.permute.xlu0 %506
    %v509 = vadd.f32 %v499, %v507
    %v510 = vtanh.pop %v509
    %512 = vrot.lane.b32.xlu0 %v510, 64
    %v513 = vpop.permute.xlu0 %512
    %v515 = vmul.f32 %v496, %v513
    %517 = vrot.lane.b32.xlu0 %v515, 32
    %v518 = vpop.permute.xlu0 %517
    %s520 = scalar_lea.vmem [#allocation11], 24
    %521 = vst.msk [vmem:[%s520] sm:$0xff] %vm200, %v518
    %s522 = scalar_lea.vmem [#allocation4], 32
    %v523 = vld [vmem:[%s522] sm:$0xff]
    %v524 = vpack.c.bf16 %v515, %v515
    %526 = vrot.lane.b32.xlu0 %v524, 32
    %v527 = vpop.permute.xlu0 %526
    %v529 = vsel %vm200, %v527, 0
    %531 = vmatprep.subr.bf16.mxu0 0
    %532 = vmatpush1.bf16.msra.mxu0 %v196
    %533 = vmatprep.subr.bf16.mxu0 0
    %534 = vmatpush1.bf16.msra.mxu0 %v197
    %535 = vmatprep.subr.bf16.mxu0 0
    %536 = vmatpush1.bf16.msra.mxu0 0
    %537 = vmatprep.subr.bf16.mxu0 0
    %538 = vmatpush1.bf16.msra.mxu0 0
    %539 = vmatprep.subr.bf16.mxu0 0
    %540 = vmatpush1.bf16.msra.mxu0 0
    %541 = vmatprep.subr.bf16.mxu0 0
    %542 = vmatpush1.bf16.msra.mxu0 0
    %543 = vmatprep.subr.bf16.mxu0 0
    %544 = vmatpush1.bf16.msra.mxu0 0
    %545 = vmatprep.subr.bf16.mxu0 0
    %546 = vmatpush1.bf16.msra.mxu0 0
    %547 = vmatprep.subr.bf16.mxu0 0
    %548 = vmatpush1.bf16.msra.mxu0 0
    %549 = vmatprep.subr.bf16.mxu0 0
    %550 = vmatpush1.bf16.msra.mxu0 0
    %551 = vmatprep.subr.bf16.mxu0 0
    %552 = vmatpush1.bf16.msra.mxu0 0
    %553 = vmatprep.subr.bf16.mxu0 0
    %554 = vmatpush1.bf16.msra.mxu0 0
    %555 = vmatprep.subr.bf16.mxu0 0
    %556 = vmatpush1.bf16.msra.mxu0 0
    %557 = vmatprep.subr.bf16.mxu0 0
    %558 = vmatpush1.bf16.msra.mxu0 0
    %559 = vmatprep.subr.bf16.mxu0 0
    %560 = vmatpush1.bf16.msra.mxu0 0
    %561 = vmatprep.subr.bf16.mxu0 0
    %562 = vmatpush1.bf16.msra.mxu0 0
    %563 = vmatprep.mubr.bf16.mxu0 0
    %564 = vmatmul.mubr.bf16.gmra.mrb[0].mxu0 %v529
    %v565 = vpop.f32.mrb[0].mxu0
    %v566 = vadd.f32 0.0, %v565
    %v567 = vpop.f32.mrb[0].mxu0
    %v568 = vpop.f32.mrb[0].mxu0
    %v569 = vpop.f32.mrb[0].mxu0
    %570 = vdwg.mxu0
    %v571 = vadd.f32 %v523, %v566
    %v572 = vxor.u32 %v571, 2147483648
    %v573 = vmul.f32 %v572, 1.442695
    %v574 = vpow.pop %v573
    %v575 = vadd.f32 %v574, 1.0
    %v576 = vrcp.pop %v575
    %v577 = vmul.f32 1.0, %v576
    %v578 = vmul.f32 %v577, 2.0
    %v579 = vsub.f32 %v578, 1.0
    %v580 = vmul.f32 %v577, %v509
    %582 = vrot.lane.b32.xlu0 %v579, 64
    %v583 = vpop.permute.xlu0 %582
    %v585 = vmul.f32 %v577, %v583
    %587 = vrot.lane.b32.xlu0 %v585, 32
    %v588 = vpop.permute.xlu0 %587
    %v590 = vadd.f32 %v580, %v588
    %v591 = vtanh.pop %v590
    %593 = vrot.lane.b32.xlu0 %v591, 64
    %v594 = vpop.permute.xlu0 %593
    %v596 = vmul.f32 %v577, %v594
    %598 = vrot.lane.b32.xlu0 %v596, 32
    %v599 = vpop.permute.xlu0 %598
    %s601 = scalar_lea.vmem [#allocation11], 32
    %602 = vst.msk [vmem:[%s601] sm:$0xff] %vm200, %v599
    %s603 = scalar_lea.vmem [#allocation4], 40
    %v604 = vld [vmem:[%s603] sm:$0xff]
    %v605 = vpack.c.bf16 %v596, %v596
    %607 = vrot.lane.b32.xlu0 %v605, 32
    %v608 = vpop.permute.xlu0 %607
    %v610 = vsel %vm200, %v608, 0
    %612 = vmatprep.subr.bf16.mxu0 0
    %613 = vmatpush1.bf16.msra.mxu0 %v196
    %614 = vmatprep.subr.bf16.mxu0 0
    %615 = vmatpush1.bf16.msra.mxu0 %v197
    %616 = vmatprep.subr.bf16.mxu0 0
    %617 = vmatpush1.bf16.msra.mxu0 0
    %618 = vmatprep.subr.bf16.mxu0 0
    %619 = vmatpush1.bf16.msra.mxu0 0
    %620 = vmatprep.subr.bf16.mxu0 0
    %621 = vmatpush1.bf16.msra.mxu0 0
    %622 = vmatprep.subr.bf16.mxu0 0
    %623 = vmatpush1.bf16.msra.mxu0 0
    %624 = vmatprep.subr.bf16.mxu0 0
    %625 = vmatpush1.bf16.msra.mxu0 0
    %626 = vmatprep.subr.bf16.mxu0 0
    %627 = vmatpush1.bf16.msra.mxu0 0
    %628 = vmatprep.subr.bf16.mxu0 0
    %629 = vmatpush1.bf16.msra.mxu0 0
    %630 = vmatprep.subr.bf16.mxu0 0
    %631 = vmatpush1.bf16.msra.mxu0 0
    %632 = vmatprep.subr.bf16.mxu0 0
    %633 = vmatpush1.bf16.msra.mxu0 0
    %634 = vmatprep.subr.bf16.mxu0 0
    %635 = vmatpush1.bf16.msra.mxu0 0
    %636 = vmatprep.subr.bf16.mxu0 0
    %637 = vmatpush1.bf16.msra.mxu0 0
    %638 = vmatprep.subr.bf16.mxu0 0
    %639 = vmatpush1.bf16.msra.mxu0 0
    %640 = vmatprep.subr.bf16.mxu0 0
    %641 = vmatpush1.bf16.msra.mxu0 0
    %642 = vmatprep.subr.bf16.mxu0 0
    %643 = vmatpush1.bf16.msra.mxu0 0
    %644 = vmatprep.mubr.bf16.mxu0 0
    %645 = vmatmul.mubr.bf16.gmra.mrb[0].mxu0 %v610
    %v646 = vpop.f32.mrb[0].mxu0
    %v647 = vadd.f32 0.0, %v646
    %v648 = vpop.f32.mrb[0].mxu0
    %v649 = vpop.f32.mrb[0].mxu0
    %v650 = vpop.f32.mrb[0].mxu0
    %651 = vdwg.mxu0
    %v652 = vadd.f32 %v604, %v647
    %v653 = vxor.u32 %v652, 2147483648
    %v654 = vmul.f32 %v653, 1.442695
    %v655 = vpow.pop %v654
    %v656 = vadd.f32 %v655, 1.0
    %v657 = vrcp.pop %v656
    %v658 = vmul.f32 1.0, %v657
    %v659 = vmul.f32 %v658, 2.0
    %v660 = vsub.f32 %v659, 1.0
    %v661 = vmul.f32 %v658, %v590
    %663 = vrot.lane.b32.xlu0 %v660, 64
    %v664 = vpop.permute.xlu0 %663
    %v666 = vmul.f32 %v658, %v664
    %668 = vrot.lane.b32.xlu0 %v666, 32
    %v669 = vpop.permute.xlu0 %668
    %v671 = vadd.f32 %v661, %v669
    %v672 = vtanh.pop %v671
    %674 = vrot.lane.b32.xlu0 %v672, 64
    %v675 = vpop.permute.xlu0 %674
    %v677 = vmul.f32 %v658, %v675
    %679 = vrot.lane.b32.xlu0 %v677, 32
    %v680 = vpop.permute.xlu0 %679
    %s682 = scalar_lea.vmem [#allocation11], 40
    %683 = vst.msk [vmem:[%s682] sm:$0xff] %vm200, %v680
    %s684 = scalar_lea.vmem [#allocation4], 48
    %v685 = vld [vmem:[%s684] sm:$0xff]
    %v686 = vpack.c.bf16 %v677, %v677
    %688 = vrot.lane.b32.xlu0 %v686, 32
    %v689 = vpop.permute.xlu0 %688
    %v691 = vsel %vm200, %v689, 0
    %693 = vmatprep.subr.bf16.mxu0 0
    %694 = vmatpush1.bf16.msra.mxu0 %v196
    %695 = vmatprep.subr.bf16.mxu0 0
    %696 = vmatpush1.bf16.msra.mxu0 %v197
    %697 = vmatprep.subr.bf16.mxu0 0
    %698 = vmatpush1.bf16.msra.mxu0 0
    %699 = vmatprep.subr.bf16.mxu0 0
    %700 = vmatpush1.bf16.msra.mxu0 0
    %701 = vmatprep.subr.bf16.mxu0 0
    %702 = vmatpush1.bf16.msra.mxu0 0
    %703 = vmatprep.subr.bf16.mxu0 0
    %704 = vmatpush1.bf16.msra.mxu0 0
    %705 = vmatprep.subr.bf16.mxu0 0
    %706 = vmatpush1.bf16.msra.mxu0 0
    %707 = vmatprep.subr.bf16.mxu0 0
    %708 = vmatpush1.bf16.msra.mxu0 0
    %709 = vmatprep.subr.bf16.mxu0 0
    %710 = vmatpush1.bf16.msra.mxu0 0
    %711 = vmatprep.subr.bf16.mxu0 0
    %712 = vmatpush1.bf16.msra.mxu0 0
    %713 = vmatprep.subr.bf16.mxu0 0
    %714 = vmatpush1.bf16.msra.mxu0 0
    %715 = vmatprep.subr.bf16.mxu0 0
    %716 = vmatpush1.bf16.msra.mxu0 0
    %717 = vmatprep.subr.bf16.mxu0 0
    %718 = vmatpush1.bf16.msra.mxu0 0
    %719 = vmatprep.subr.bf16.mxu0 0
    %720 = vmatpush1.bf16.msra.mxu0 0
    %721 = vmatprep.subr.bf16.mxu0 0
    %722 = vmatpush1.bf16.msra.mxu0 0
    %723 = vmatprep.subr.bf16.mxu0 0
    %724 = vmatpush1.bf16.msra.mxu0 0
    %725 = vmatprep.mubr.bf16.mxu0 0
    %726 = vmatmul.mubr.bf16.gmra.mrb[0].mxu0 %v691
    %v727 = vpop.f32.mrb[0].mxu0
    %v728 = vadd.f32 0.0, %v727
    %v729 = vpop.f32.mrb[0].mxu0
    %v730 = vpop.f32.mrb[0].mxu0
    %v731 = vpop.f32.mrb[0].mxu0
    %732 = vdwg.mxu0
    %v733 = vadd.f32 %v685, %v728
    %v734 = vxor.u32 %v733, 2147483648
    %v735 = vmul.f32 %v734, 1.442695
    %v736 = vpow.pop %v735
    %v737 = vadd.f32 %v736, 1.0
    %v738 = vrcp.pop %v737
    %v739 = vmul.f32 1.0, %v738
    %v740 = vmul.f32 %v739, 2.0
    %v741 = vsub.f32 %v740, 1.0
    %v742 = vmul.f32 %v739, %v671
    %744 = vrot.lane.b32.xlu0 %v741, 64
    %v745 = vpop.permute.xlu0 %744
    %v747 = vmul.f32 %v739, %v745
    %749 = vrot.lane.b32.xlu0 %v747, 32
    %v750 = vpop.permute.xlu0 %749
    %v752 = vadd.f32 %v742, %v750
    %v753 = vtanh.pop %v752
    %755 = vrot.lane.b32.xlu0 %v753, 64
    %v756 = vpop.permute.xlu0 %755
    %v758 = vmul.f32 %v739, %v756
    %760 = vrot.lane.b32.xlu0 %v758, 32
    %v761 = vpop.permute.xlu0 %760
    %s763 = scalar_lea.vmem [#allocation11], 48
    %764 = vst.msk [vmem:[%s763] sm:$0xff] %vm200, %v761
    %s765 = scalar_lea.vmem [#allocation4], 56
    %v766 = vld [vmem:[%s765] sm:$0xff]
    %v767 = vpack.c.bf16 %v758, %v758
    %769 = vrot.lane.b32.xlu0 %v767, 32
    %v770 = vpop.permute.xlu0 %769
    %v772 = vsel %vm200, %v770, 0
    %774 = vmatprep.subr.bf16.mxu0 0
    %775 = vmatpush1.bf16.msra.mxu0 %v196
    %776 = vmatprep.subr.bf16.mxu0 0
    %777 = vmatpush1.bf16.msra.mxu0 %v197
    %778 = vmatprep.subr.bf16.mxu0 0
    %779 = vmatpush1.bf16.msra.mxu0 0
    %780 = vmatprep.subr.bf16.mxu0 0
    %781 = vmatpush1.bf16.msra.mxu0 0
    %782 = vmatprep.subr.bf16.mxu0 0
    %783 = vmatpush1.bf16.msra.mxu0 0
    %784 = vmatprep.subr.bf16.mxu0 0
    %785 = vmatpush1.bf16.msra.mxu0 0
    %786 = vmatprep.subr.bf16.mxu0 0
    %787 = vmatpush1.bf16.msra.mxu0 0
    %788 = vmatprep.subr.bf16.mxu0 0
    %789 = vmatpush1.bf16.msra.mxu0 0
    %790 = vmatprep.subr.bf16.mxu0 0
    %791 = vmatpush1.bf16.msra.mxu0 0
    %792 = vmatprep.subr.bf16.mxu0 0
    %793 = vmatpush1.bf16.msra.mxu0 0
    %794 = vmatprep.subr.bf16.mxu0 0
    %795 = vmatpush1.bf16.msra.mxu0 0
    %796 = vmatprep.subr.bf16.mxu0 0
    %797 = vmatpush1.bf16.msra.mxu0 0
    %798 = vmatprep.subr.bf16.mxu0 0
    %799 = vmatpush1.bf16.msra.mxu0 0
    %800 = vmatprep.subr.bf16.mxu0 0
    %801 = vmatpush1.bf16.msra.mxu0 0
    %802 = vmatprep.subr.bf16.mxu0 0
    %803 = vmatpush1.bf16.msra.mxu0 0
    %804 = vmatprep.subr.bf16.mxu0 0
    %805 = vmatpush1.bf16.msra.mxu0 0
    %806 = vmatprep.mubr.bf16.mxu0 0
    %807 = vmatmul.mubr.bf16.gmra.mrb[0].mxu0 %v772
    %v808 = vpop.f32.mrb[0].mxu0
    %v809 = vadd.f32 0.0, %v808
    %v810 = vpop.f32.mrb[0].mxu0
    %v811 = vpop.f32.mrb[0].mxu0
    %v812 = vpop.f32.mrb[0].mxu0
    %813 = vdwg.mxu0
    %v814 = vadd.f32 %v766, %v809
    %v815 = vxor.u32 %v814, 2147483648
    %v816 = vmul.f32 %v815, 1.442695
    %v817 = vpow.pop %v816
    %v818 = vadd.f32 %v817, 1.0
    %v819 = vrcp.pop %v818
    %v820 = vmul.f32 1.0, %v819
    %v821 = vmul.f32 %v820, 2.0
    %v822 = vsub.f32 %v821, 1.0
    %v823 = vmul.f32 %v820, %v752
    %825 = vrot.lane.b32.xlu0 %v822, 64
    %v826 = vpop.permute.xlu0 %825
    %v828 = vmul.f32 %v820, %v826
    %830 = vrot.lane.b32.xlu0 %v828, 32
    %v831 = vpop.permute.xlu0 %830
    %v833 = vadd.f32 %v823, %v831
    %v834 = vtanh.pop %v833
    %836 = vrot.lane.b32.xlu0 %v834, 64
    %v837 = vpop.permute.xlu0 %836
    %v839 = vmul.f32 %v820, %v837
    %841 = vrot.lane.b32.xlu0 %v839, 32
    %v842 = vpop.permute.xlu0 %841
    %s844 = scalar_lea.vmem [#allocation11], 56
    %845 = vst.msk [vmem:[%s844] sm:$0xff] %vm200, %v842
    %846 = vst.msk [vmem:[#allocation2] sm:$0xff] %vm200, %v842
    %848 = vrot.lane.b32.xlu0 %v833, 96
    %v849 = vpop.permute.xlu0 %848
    %851 = vst.msk [vmem:[#allocation3] sm:$0xff] %vm200, %v849
    // Predicated region
    $region34: #{tpu_custom_call.1} parent=1 // pred_check
      _
    $region35: #{tpu_custom_call.1} parent=1 // pred_check_branch
      %853 = sbr.rel (0) target = $region37
    $region36: #{tpu_custom_call.1} parent=1 // pred_region
      %s855 = ssub.s32 1024, 1024
      %856 = vsyncadd [#allocation7], %s855
      %s857 = sshll.u32 [#allocation11], 4
      %s858 = int_to_ptr.vmem [resolvable:$true] %s857
      %863 = dma.vmem_to_hbm [thread:$0]  %s858, 1024, %s4, [#allocation7], 128, 128, 8
    $region37: #{tpu_custom_call.1} parent=1 // pred_fallthru
      _
    // Predicated region
    $region38: #{tpu_custom_call.1} parent=1 // pred_check
      _
    $region39: #{tpu_custom_call.1} parent=1 // pred_check_branch
      %865 = sbr.rel (0) target = $region41
    $region40: #{tpu_custom_call.1} parent=1 // pred_region
      %866 = dma.done [#allocation7], 1024
    $region41: #{tpu_custom_call.1} parent=1 // pred_fallthru
      _
    %867 = vsyncpa [#allocation6], 1
    %868 = vsyncpa [#allocation9], 1
    %869 = vsyncpa [#allocation7], 1

</llo_original>
